<compile_context>
chip_gen: v7x
topology: tpu7x:2x2x1
jax: 0.10.0
libtpu: 0.0.40
codegen_flags: <defaults>
</compile_context>

<pallas_src>
import jax
import jax.numpy as jnp
from jax.experimental import pallas as pl
from jax.experimental.pallas import tpu as pltpu

HIDDEN = 64   # Qnet.hidden_space is hard-coded to 64
LANE = 128    # TPU lane width


# -----------------------------------------------------------------------------
# Pallas kernel: fc1 + ReLU -> LSTM recurrence -> ReLU -> packed fc2, in VMEM.
# -----------------------------------------------------------------------------
def qnet_kernel(x_ref, h0_ref, c0_ref,
                w1_ref, b1_ref,
                wih_ref, whh_ref, bl_ref,
                w2_ref, b2_ref,
                out_ref, hc_ref,
                hseq_ref):
    T, Bt, S = x_ref.shape           # time-major batch tile
    H = h0_ref.shape[-1]

    # ---- fc1 + ReLU over all (time * batch) rows at once: one MXU matmul,
    #      bf16 operands, f32 accumulation. ----
    x = x_ref[...].reshape(T * Bt, S).astype(jnp.bfloat16)
    z1 = jnp.dot(x, w1_ref[...], preferred_element_type=jnp.float32) + b1_ref[...]
    z1 = jnp.maximum(z1, 0.0)

    # ---- hoisted input-gate projection for every timestep (bias folded in),
    #      kept time-major so the per-step read xg[t] is a leading-axis index. ----
    xg = (jnp.dot(z1.astype(jnp.bfloat16), wih_ref[...],
                  preferred_element_type=jnp.float32)
          + bl_ref[...]).reshape(T, Bt, 4 * H)

    # ---- single-layer LSTM recurrence (PyTorch gate order i, f, g, o).
    #      g-gate columns were pre-scaled by 2, so one full-width sigmoid per
    #      step suffices and tanh(g) = 2*sigmoid(2g) - 1 is a VPU fixup. ----
    whh = whh_ref[...]               # (H, 4H) bf16, stays in vregs
    h = h0_ref[...]                  # (Bt, H) f32
    c = c0_ref[...]                  # (Bt, H) f32
    for t in range(T):               # T small & static -> fully unrolled
        gates = xg[t] + jnp.dot(h.astype(jnp.bfloat16), whh,
                                preferred_element_type=jnp.float32)
        sg = jax.nn.sigmoid(gates)               # one EUP pass over 4H
        i_g = sg[:, 0 * H:1 * H]
        f_g = sg[:, 1 * H:2 * H]
        g_g = 2.0 * sg[:, 2 * H:3 * H] - 1.0     # tanh via pre-scaled sigmoid
        o_g = sg[:, 3 * H:4 * H]
        c = f_g * c + i_g * g_g
        h = o_g * jnp.tanh(c)
        # Per-step VMEM store keeps only (h, c) live across iterations.
        hseq_ref[:, t * H:(t + 1) * H] = jnp.maximum(h, 0.0)   # ReLU(output)

    # ---- block-diagonal fc2: (Bt, T*H) @ (T*H, P) -> packed, lane-dense
    #      (Bt, P) output row; single unmasked HBM writeback per tile. ----
    seq = hseq_ref[...].astype(jnp.bfloat16)
    out_ref[...] = (jnp.dot(seq, w2_ref[...], preferred_element_type=jnp.float32)
                    + b2_ref[...])

    # ---- final recurrent state packed into one 128-lane store. ----
    hc_ref[...] = jnp.concatenate([h, c], axis=-1)


# -----------------------------------------------------------------------------
# Batch-tile selection: big tiles to fill the MXU M-dim & amortize grid
# overhead, but keep >= 2 parallel grid steps when the batch allows (v7x 2 TCs).
# -----------------------------------------------------------------------------
def _pick_batch_tile(B):
    if B <= 8 or B % 8 != 0:
        return B                      # tiny / ragged batch: single tile
    half = (B // 2) // 8 * 8
    if half < 8:
        return B
    bt = min(256, half)
    while B % bt != 0:                # tile must divide the batch exactly
        bt -= 8
    return bt


# -----------------------------------------------------------------------------
# One-time parameter preparation (hoisted out of the per-call wrapper).
# -----------------------------------------------------------------------------
def prepare_params(params, seq_len):
    H = HIDDEN
    T = seq_len
    A = params["w2"].shape[1]
    P = ((T * A + LANE - 1) // LANE) * LANE        # packed fc2 output lanes

    # Fold x2 into the g-gate columns (PyTorch order i, f, g, o) so the kernel
    # needs a single full-width sigmoid: tanh(g) = 2*sigmoid(2g) - 1.
    def scale_g(w):
        return w.at[..., 2 * H:3 * H].multiply(2.0)

    # Block-diagonal fc2 weight + packed bias: one matmul emits (Bt, T*A)
    # packed into P lanes. (Grows with T; fine for DRQN-sized T.)
    w2_blk = jnp.zeros((T * H, P), jnp.float32)
    b2_pack = jnp.zeros((1, P), jnp.float32)
    for t in range(T):
        w2_blk = w2_blk.at[t * H:(t + 1) * H, t * A:(t + 1) * A].set(params["w2"])
        b2_pack = b2_pack.at[0, t * A:(t + 1) * A].set(params["b2"][0])

    return {
        "w1": params["w1"].astype(jnp.bfloat16),
        "b1": params["b1"],
        "w_ih": scale_g(params["w_ih"]).astype(jnp.bfloat16),
        "w_hh": scale_g(params["w_hh"]).astype(jnp.bfloat16),
        "b_lstm": scale_g(params["b_lstm"]),
        "w2_blk": w2_blk.astype(jnp.bfloat16),
        "b2_pack": b2_pack,
        "A": A, "T": T, "P": P,
    }


# -----------------------------------------------------------------------------
# Wrapper
# -----------------------------------------------------------------------------
def qnet_forward(x, h, c, prep):
    B, T, S = x.shape
    H = HIDDEN
    A, P = prep["A"], prep["P"]
    assert T == prep["T"], "prepare_params was built for a different seq_len"

    Bt = _pick_batch_tile(B)
    grid = (B // Bt,)

    x_tm = jnp.transpose(x, (1, 0, 2))   # time-major: (T, B, S)

    out, hc = pl.pallas_call(
        qnet_kernel,
        out_shape=(
            jax.ShapeDtypeStruct((B, P), jnp.float32),
            jax.ShapeDtypeStruct((B, 2 * H), jnp.float32),
        ),
        grid_spec=pltpu.PrefetchScalarGridSpec(
            num_scalar_prefetch=0,
            grid=grid,
            in_specs=[
                pl.BlockSpec((T, Bt, S), lambda b: (0, b, 0)),    # x (time-major)
                pl.BlockSpec((Bt, H), lambda b: (b, 0)),          # h0
                pl.BlockSpec((Bt, H), lambda b: (b, 0)),          # c0
                pl.BlockSpec((S, H), lambda b: (0, 0)),           # w1 (bf16)
                pl.BlockSpec((1, H), lambda b: (0, 0)),           # b1
                pl.BlockSpec((H, 4 * H), lambda b: (0, 0)),       # w_ih (bf16)
                pl.BlockSpec((H, 4 * H), lambda b: (0, 0)),       # w_hh (bf16)
                pl.BlockSpec((1, 4 * H), lambda b: (0, 0)),       # b_ih + b_hh
                pl.BlockSpec((T * H, P), lambda b: (0, 0)),       # fc2 block-diag
                pl.BlockSpec((1, P), lambda b: (0, 0)),           # fc2 bias packed
            ],
            out_specs=(
                pl.BlockSpec((Bt, P), lambda b: (b, 0)),          # packed Q-values
                pl.BlockSpec((Bt, 2 * H), lambda b: (b, 0)),      # packed (h, c)
            ),
            scratch_shapes=[pltpu.VMEM((Bt, T * H), jnp.float32)],
        ),
        compiler_params=pltpu.CompilerParams(
            dimension_semantics=("parallel",)),
    )(x_tm, h[0], c[0],
      prep["w1"], prep["b1"],
      prep["w_ih"], prep["w_hh"], prep["b_lstm"],
      prep["w2_blk"], prep["b2_pack"])

    q = out[:, :T * A].reshape(B, T, A)
    new_h = hc[:, :H][None]
    new_c = hc[:, H:][None]
    return q, new_h, new_c


# -----------------------------------------------------------------------------
# Pure-JAX reference (PyTorch gate order, raw f32 params)
# -----------------------------------------------------------------------------
def qnet_ref(x, h, c, params):
    B, T, _ = x.shape
    H = HIDDEN
    z1 = jax.nn.relu(x @ params["w1"] + params["b1"][0])
    h_t, c_t = h[0], c[0]
    outs = []
    for t in range(T):
        gates = (z1[:, t, :] @ params["w_ih"] + h_t @ params["w_hh"]
                 + params["b_lstm"][0])
        i = jax.nn.sigmoid(gates[:, :H])
        f = jax.nn.sigmoid(gates[:, H:2 * H])
        g = jnp.tanh(gates[:, 2 * H:3 * H])
        o = jax.nn.sigmoid(gates[:, 3 * H:])
        c_t = f * c_t + i * g
        h_t = o * jnp.tanh(c_t)
        outs.append(h_t)
    seq = jax.nn.relu(jnp.stack(outs, axis=1))
    y = seq @ params["w2"] + params["b2"][0]
    return y, h_t[None], c_t[None]


# -----------------------------------------------------------------------------
# Deterministic parameter init (PyTorch-style uniform(-1/sqrt(fan_in), ...))
# -----------------------------------------------------------------------------
def init_params(key, state_space, action_space, hidden=HIDDEN):
    ks = jax.random.split(key, 8)

    def u(k, shape, fan_in):
        bound = 1.0 / float(fan_in) ** 0.5
        return jax.random.uniform(k, shape, jnp.float32, -bound, bound)

    return {
        "w1": u(ks[0], (state_space, hidden), state_space),      # fc1.weight^T
        "b1": u(ks[1], (1, hidden), state_space),                # fc1.bias
        "w_ih": u(ks[2], (hidden, 4 * hidden), hidden),          # lstm.weight_ih_l0^T
        "w_hh": u(ks[3], (hidden, 4 * hidden), hidden),          # lstm.weight_hh_l0^T
        "b_lstm": (u(ks[4], (1, 4 * hidden), hidden)             # b_ih + b_hh
                   + u(ks[5], (1, 4 * hidden), hidden)),
        "w2": u(ks[6], (hidden, action_space), hidden),          # fc2.weight^T
        "b2": u(ks[7], (1, action_space), hidden),               # fc2.bias
    }


if __name__ == "__main__":
    key = jax.random.PRNGKey(0)
    k_param, k_x, k_x2 = jax.random.split(key, 3)

    T = 8                  # sequence length
    STATE_SPACE = 4        # e.g. CartPole observation size
    ACTION_SPACE = 2

    params = init_params(k_param, STATE_SPACE, ACTION_SPACE)
    prep = prepare_params(params, seq_len=T)      # one-time param massaging

    # bf16 MXU operands -> compare against the f32 reference with a loose tol.
    TOL = dict(atol=5e-2, rtol=5e-2)

    # ---- small shape (matches DRQN usage): B=2 ----
    B = 2
    x = jax.random.normal(k_x, (B, T, STATE_SPACE), jnp.float32)
    h0 = jnp.zeros((1, B, HIDDEN), jnp.float32)   # init_hidden_state(training=True)
    c0 = jnp.zeros((1, B, HIDDEN), jnp.float32)

    q, new_h, new_c = qnet_forward(x, h0, c0, prep)
    jax.block_until_ready((q, new_h, new_c))

    q_ref, h_ref, c_ref = qnet_ref(x, h0, c0, params)
    assert q.shape == (B, T, ACTION_SPACE)
    assert new_h.shape == (1, B, HIDDEN) and new_c.shape == (1, B, HIDDEN)
    assert jnp.allclose(q, q_ref, **TOL)
    assert jnp.allclose(new_h, h_ref, **TOL)
    assert jnp.allclose(new_c, c_ref, **TOL)

    # ---- multi-tile batch: exercises the tiled / parallel grid path ----
    B2 = 16
    x2 = jax.random.normal(k_x2, (B2, T, STATE_SPACE), jnp.float32)
    h02 = jnp.zeros((1, B2, HIDDEN), jnp.float32)
    c02 = jnp.zeros((1, B2, HIDDEN), jnp.float32)
    q2, nh2, nc2 = qnet_forward(x2, h02, c02, prep)
    jax.block_until_ready((q2, nh2, nc2))
    q2_ref, h2_ref, c2_ref = qnet_ref(x2, h02, c02, params)
    assert jnp.allclose(q2, q2_ref, **TOL)
    assert jnp.allclose(nh2, h2_ref, **TOL)
    assert jnp.allclose(nc2, c2_ref, **TOL)

    print("KERNEL_OK")
</pallas_src>

<mosaic_0001>
module attributes {stable_mosaic.version = 11 : i64} {
  func.func @qnet_kernel(%arg0: i32, %arg1: memref<8x2x4xf32, #tpu.memory_space<vmem>>, %arg2: memref<2x64xf32, #tpu.memory_space<vmem>>, %arg3: memref<2x64xf32, #tpu.memory_space<vmem>>, %arg4: memref<4x64xbf16, #tpu.memory_space<vmem>>, %arg5: memref<1x64xf32, #tpu.memory_space<vmem>>, %arg6: memref<64x256xbf16, #tpu.memory_space<vmem>>, %arg7: memref<64x256xbf16, #tpu.memory_space<vmem>>, %arg8: memref<1x256xf32, #tpu.memory_space<vmem>>, %arg9: memref<512x128xbf16, #tpu.memory_space<vmem>>, %arg10: memref<1x128xf32, #tpu.memory_space<vmem>>, %arg11: memref<2x128xf32, #tpu.memory_space<vmem>>, %arg12: memref<2x128xf32, #tpu.memory_space<vmem>>, %arg13: memref<2x512xf32, #tpu.memory_space<vmem>>) attributes {dimension_semantics = [#tpu.dimension_semantics<parallel>], iteration_bounds = array<i64: 1>, scalar_prefetch = 0 : i64, scratch_operands = 1 : i64, tpu.core_type = #tpu.core_type<tc>, window_params = [{transform_indices = @transform_0, window_bounds = array<i64: 8, 2, 4>}, {transform_indices = @transform_1, window_bounds = array<i64: 2, 64>}, {transform_indices = @transform_2, window_bounds = array<i64: 2, 64>}, {pipeline_mode = #tpu.pipeline_mode<synchronous>, transform_indices = @transform_3, window_bounds = array<i64: 4, 64>}, {pipeline_mode = #tpu.pipeline_mode<synchronous>, transform_indices = @transform_4, window_bounds = array<i64: 1, 64>}, {pipeline_mode = #tpu.pipeline_mode<synchronous>, transform_indices = @transform_5, window_bounds = array<i64: 64, 256>}, {pipeline_mode = #tpu.pipeline_mode<synchronous>, transform_indices = @transform_6, window_bounds = array<i64: 64, 256>}, {pipeline_mode = #tpu.pipeline_mode<synchronous>, transform_indices = @transform_7, window_bounds = array<i64: 1, 256>}, {pipeline_mode = #tpu.pipeline_mode<synchronous>, transform_indices = @transform_8, window_bounds = array<i64: 512, 128>}, {pipeline_mode = #tpu.pipeline_mode<synchronous>, transform_indices = @transform_9, window_bounds = array<i64: 1, 128>}, {transform_indices = @transform_10, window_bounds = array<i64: 2, 128>}, {transform_indices = @transform_11, window_bounds = array<i64: 2, 128>}]} {
    %c0 = arith.constant 0 : index
    %c0_0 = arith.constant 0 : index
    %c0_1 = arith.constant 0 : index
    %0 = vector.load %arg1[%c0, %c0_0, %c0_1] : memref<8x2x4xf32, #tpu.memory_space<vmem>>, vector<8x2x4xf32>
    %1 = vector.shape_cast %0 : vector<8x2x4xf32> to vector<16x4xf32>
    %2 = arith.truncf %1 : vector<16x4xf32> to vector<16x4xbf16>
    %c0_2 = arith.constant 0 : index
    %c0_3 = arith.constant 0 : index
    %3 = vector.load %arg4[%c0_2, %c0_3] : memref<4x64xbf16, #tpu.memory_space<vmem>>, vector<4x64xbf16>
    %cst = arith.constant dense<0.000000e+00> : vector<16x64xf32>
    %4 = tpu.matmul %2, %3, %cst {dimension_numbers = #tpu.dot_dimension_numbers<[1], [0], [0], [1], [0, 0, 1, 1], [], []>} : vector<16x4xbf16>, vector<4x64xbf16>, vector<16x64xf32> -> vector<16x64xf32>
    %c0_4 = arith.constant 0 : index
    %c0_5 = arith.constant 0 : index
    %5 = vector.load %arg5[%c0_4, %c0_5] : memref<1x64xf32, #tpu.memory_space<vmem>>, vector<1x64xf32>
    %6 = vector.broadcast %5 : vector<1x64xf32> to vector<16x64xf32>
    %7 = arith.addf %4, %6 : vector<16x64xf32>
    %cst_6 = arith.constant 0.000000e+00 : f32
    %8 = vector.broadcast %cst_6 : f32 to vector<16x64xf32>
    %9 = arith.maximumf %7, %8 : vector<16x64xf32>
    %10 = arith.truncf %9 : vector<16x64xf32> to vector<16x64xbf16>
    %c0_7 = arith.constant 0 : index
    %c0_8 = arith.constant 0 : index
    %11 = vector.load %arg6[%c0_7, %c0_8] : memref<64x256xbf16, #tpu.memory_space<vmem>>, vector<64x256xbf16>
    %cst_9 = arith.constant dense<0.000000e+00> : vector<16x256xf32>
    %12 = tpu.matmul %10, %11, %cst_9 {dimension_numbers = #tpu.dot_dimension_numbers<[1], [0], [0], [1], [0, 0, 1, 1], [], []>} : vector<16x64xbf16>, vector<64x256xbf16>, vector<16x256xf32> -> vector<16x256xf32>
    %c0_10 = arith.constant 0 : index
    %c0_11 = arith.constant 0 : index
    %13 = vector.load %arg8[%c0_10, %c0_11] : memref<1x256xf32, #tpu.memory_space<vmem>>, vector<1x256xf32>
    %14 = vector.broadcast %13 : vector<1x256xf32> to vector<16x256xf32>
    %15 = arith.addf %12, %14 : vector<16x256xf32>
    %16 = vector.shape_cast %15 : vector<16x256xf32> to vector<8x2x256xf32>
    %c0_12 = arith.constant 0 : index
    %c0_13 = arith.constant 0 : index
    %17 = vector.load %arg7[%c0_12, %c0_13] : memref<64x256xbf16, #tpu.memory_space<vmem>>, vector<64x256xbf16>
    %c0_14 = arith.constant 0 : index
    %c0_15 = arith.constant 0 : index
    %18 = vector.load %arg2[%c0_14, %c0_15] : memref<2x64xf32, #tpu.memory_space<vmem>>, vector<2x64xf32>
    %c0_16 = arith.constant 0 : index
    %c0_17 = arith.constant 0 : index
    %19 = vector.load %arg3[%c0_16, %c0_17] : memref<2x64xf32, #tpu.memory_space<vmem>>, vector<2x64xf32>
    %20 = vector.extract_strided_slice %16 {offsets = [0, 0, 0], sizes = [1, 2, 256], strides = [1, 1, 1]} : vector<8x2x256xf32> to vector<1x2x256xf32>
    %21 = vector.shape_cast %20 : vector<1x2x256xf32> to vector<2x256xf32>
    %22 = arith.truncf %18 : vector<2x64xf32> to vector<2x64xbf16>
    %cst_18 = arith.constant dense<0.000000e+00> : vector<2x256xf32>
    %23 = tpu.matmul %22, %17, %cst_18 {dimension_numbers = #tpu.dot_dimension_numbers<[1], [0], [0], [1], [0, 0, 1, 1], [], []>} : vector<2x64xbf16>, vector<64x256xbf16>, vector<2x256xf32> -> vector<2x256xf32>
    %24 = arith.addf %21, %23 : vector<2x256xf32>
    %25 = arith.negf %24 : vector<2x256xf32>
    %26 = math.exp %25 : vector<2x256xf32>
    %cst_19 = arith.constant 1.000000e+00 : f32
    %27 = vector.broadcast %cst_19 : f32 to vector<2x256xf32>
    %28 = arith.addf %27, %26 : vector<2x256xf32>
    %29 = arith.divf %27, %28 : vector<2x256xf32>
    %30 = vector.extract_strided_slice %29 {offsets = [0, 0], sizes = [2, 64], strides = [1, 1]} : vector<2x256xf32> to vector<2x64xf32>
    %31 = vector.extract_strided_slice %29 {offsets = [0, 64], sizes = [2, 64], strides = [1, 1]} : vector<2x256xf32> to vector<2x64xf32>
    %32 = vector.extract_strided_slice %29 {offsets = [0, 128], sizes = [2, 64], strides = [1, 1]} : vector<2x256xf32> to vector<2x64xf32>
    %cst_20 = arith.constant 2.000000e+00 : f32
    %33 = vector.broadcast %cst_20 : f32 to vector<2x64xf32>
    %34 = arith.mulf %33, %32 : vector<2x64xf32>
    %cst_21 = arith.constant 1.000000e+00 : f32
    %35 = vector.broadcast %cst_21 : f32 to vector<2x64xf32>
    %36 = arith.subf %34, %35 : vector<2x64xf32>
    %37 = vector.extract_strided_slice %29 {offsets = [0, 192], sizes = [2, 64], strides = [1, 1]} : vector<2x256xf32> to vector<2x64xf32>
    %38 = arith.mulf %31, %19 : vector<2x64xf32>
    %39 = arith.mulf %30, %36 : vector<2x64xf32>
    %40 = arith.addf %38, %39 : vector<2x64xf32>
    %41 = math.tanh %40 : vector<2x64xf32>
    %42 = arith.mulf %37, %41 : vector<2x64xf32>
    %cst_22 = arith.constant 0.000000e+00 : f32
    %43 = vector.broadcast %cst_22 : f32 to vector<2x64xf32>
    %44 = arith.maximumf %42, %43 : vector<2x64xf32>
    %c0_23 = arith.constant 0 : index
    %c0_24 = arith.constant 0 : index
    %45 = vector.load %arg13[%c0_23, %c0_24] : memref<2x512xf32, #tpu.memory_space<vmem>>, vector<2x64xf32>
    tpu.vector_store %arg13[%c0_23, %c0_24], %44 {strides = array<i32>} : memref<2x512xf32, #tpu.memory_space<vmem>>, vector<2x64xf32>,
    %46 = vector.extract_strided_slice %16 {offsets = [1, 0, 0], sizes = [1, 2, 256], strides = [1, 1, 1]} : vector<8x2x256xf32> to vector<1x2x256xf32>
    %47 = vector.shape_cast %46 : vector<1x2x256xf32> to vector<2x256xf32>
    %48 = arith.truncf %42 : vector<2x64xf32> to vector<2x64xbf16>
    %cst_25 = arith.constant dense<0.000000e+00> : vector<2x256xf32>
    %49 = tpu.matmul %48, %17, %cst_25 {dimension_numbers = #tpu.dot_dimension_numbers<[1], [0], [0], [1], [0, 0, 1, 1], [], []>} : vector<2x64xbf16>, vector<64x256xbf16>, vector<2x256xf32> -> vector<2x256xf32>
    %50 = arith.addf %47, %49 : vector<2x256xf32>
    %51 = arith.negf %50 : vector<2x256xf32>
    %52 = math.exp %51 : vector<2x256xf32>
    %cst_26 = arith.constant 1.000000e+00 : f32
    %53 = vector.broadcast %cst_26 : f32 to vector<2x256xf32>
    %54 = arith.addf %53, %52 : vector<2x256xf32>
    %55 = arith.divf %53, %54 : vector<2x256xf32>
    %56 = vector.extract_strided_slice %55 {offsets = [0, 0], sizes = [2, 64], strides = [1, 1]} : vector<2x256xf32> to vector<2x64xf32>
    %57 = vector.extract_strided_slice %55 {offsets = [0, 64], sizes = [2, 64], strides = [1, 1]} : vector<2x256xf32> to vector<2x64xf32>
    %58 = vector.extract_strided_slice %55 {offsets = [0, 128], sizes = [2, 64], strides = [1, 1]} : vector<2x256xf32> to vector<2x64xf32>
    %cst_27 = arith.constant 2.000000e+00 : f32
    %59 = vector.broadcast %cst_27 : f32 to vector<2x64xf32>
    %60 = arith.mulf %59, %58 : vector<2x64xf32>
    %cst_28 = arith.constant 1.000000e+00 : f32
    %61 = vector.broadcast %cst_28 : f32 to vector<2x64xf32>
    %62 = arith.subf %60, %61 : vector<2x64xf32>
    %63 = vector.extract_strided_slice %55 {offsets = [0, 192], sizes = [2, 64], strides = [1, 1]} : vector<2x256xf32> to vector<2x64xf32>
    %64 = arith.mulf %57, %40 : vector<2x64xf32>
    %65 = arith.mulf %56, %62 : vector<2x64xf32>
    %66 = arith.addf %64, %65 : vector<2x64xf32>
    %67 = math.tanh %66 : vector<2x64xf32>
    %68 = arith.mulf %63, %67 : vector<2x64xf32>
    %cst_29 = arith.constant 0.000000e+00 : f32
    %69 = vector.broadcast %cst_29 : f32 to vector<2x64xf32>
    %70 = arith.maximumf %68, %69 : vector<2x64xf32>
    %c0_30 = arith.constant 0 : index
    %c64 = arith.constant 64 : index
    %71 = vector.load %arg13[%c0_30, %c64] : memref<2x512xf32, #tpu.memory_space<vmem>>, vector<2x64xf32>
    tpu.vector_store %arg13[%c0_30, %c64], %70 {strides = array<i32>} : memref<2x512xf32, #tpu.memory_space<vmem>>, vector<2x64xf32>,
    %72 = vector.extract_strided_slice %16 {offsets = [2, 0, 0], sizes = [1, 2, 256], strides = [1, 1, 1]} : vector<8x2x256xf32> to vector<1x2x256xf32>
    %73 = vector.shape_cast %72 : vector<1x2x256xf32> to vector<2x256xf32>
    %74 = arith.truncf %68 : vector<2x64xf32> to vector<2x64xbf16>
    %cst_31 = arith.constant dense<0.000000e+00> : vector<2x256xf32>
    %75 = tpu.matmul %74, %17, %cst_31 {dimension_numbers = #tpu.dot_dimension_numbers<[1], [0], [0], [1], [0, 0, 1, 1], [], []>} : vector<2x64xbf16>, vector<64x256xbf16>, vector<2x256xf32> -> vector<2x256xf32>
    %76 = arith.addf %73, %75 : vector<2x256xf32>
    %77 = arith.negf %76 : vector<2x256xf32>
    %78 = math.exp %77 : vector<2x256xf32>
    %cst_32 = arith.constant 1.000000e+00 : f32
    %79 = vector.broadcast %cst_32 : f32 to vector<2x256xf32>
    %80 = arith.addf %79, %78 : vector<2x256xf32>
    %81 = arith.divf %79, %80 : vector<2x256xf32>
    %82 = vector.extract_strided_slice %81 {offsets = [0, 0], sizes = [2, 64], strides = [1, 1]} : vector<2x256xf32> to vector<2x64xf32>
    %83 = vector.extract_strided_slice %81 {offsets = [0, 64], sizes = [2, 64], strides = [1, 1]} : vector<2x256xf32> to vector<2x64xf32>
    %84 = vector.extract_strided_slice %81 {offsets = [0, 128], sizes = [2, 64], strides = [1, 1]} : vector<2x256xf32> to vector<2x64xf32>
    %cst_33 = arith.constant 2.000000e+00 : f32
    %85 = vector.broadcast %cst_33 : f32 to vector<2x64xf32>
    %86 = arith.mulf %85, %84 : vector<2x64xf32>
    %cst_34 = arith.constant 1.000000e+00 : f32
    %87 = vector.broadcast %cst_34 : f32 to vector<2x64xf32>
    %88 = arith.subf %86, %87 : vector<2x64xf32>
    %89 = vector.extract_strided_slice %81 {offsets = [0, 192], sizes = [2, 64], strides = [1, 1]} : vector<2x256xf32> to vector<2x64xf32>
    %90 = arith.mulf %83, %66 : vector<2x64xf32>
    %91 = arith.mulf %82, %88 : vector<2x64xf32>
    %92 = arith.addf %90, %91 : vector<2x64xf32>
    %93 = math.tanh %92 : vector<2x64xf32>
    %94 = arith.mulf %89, %93 : vector<2x64xf32>
    %cst_35 = arith.constant 0.000000e+00 : f32
    %95 = vector.broadcast %cst_35 : f32 to vector<2x64xf32>
    %96 = arith.maximumf %94, %95 : vector<2x64xf32>
    %c0_36 = arith.constant 0 : index
    %c128 = arith.constant 128 : index
    %97 = vector.load %arg13[%c0_36, %c128] : memref<2x512xf32, #tpu.memory_space<vmem>>, vector<2x64xf32>
    tpu.vector_store %arg13[%c0_36, %c128], %96 {strides = array<i32>} : memref<2x512xf32, #tpu.memory_space<vmem>>, vector<2x64xf32>,
    %98 = vector.extract_strided_slice %16 {offsets = [3, 0, 0], sizes = [1, 2, 256], strides = [1, 1, 1]} : vector<8x2x256xf32> to vector<1x2x256xf32>
    %99 = vector.shape_cast %98 : vector<1x2x256xf32> to vector<2x256xf32>
    %100 = arith.truncf %94 : vector<2x64xf32> to vector<2x64xbf16>
    %cst_37 = arith.constant dense<0.000000e+00> : vector<2x256xf32>
    %101 = tpu.matmul %100, %17, %cst_37 {dimension_numbers = #tpu.dot_dimension_numbers<[1], [0], [0], [1], [0, 0, 1, 1], [], []>} : vector<2x64xbf16>, vector<64x256xbf16>, vector<2x256xf32> -> vector<2x256xf32>
    %102 = arith.addf %99, %101 : vector<2x256xf32>
    %103 = arith.negf %102 : vector<2x256xf32>
    %104 = math.exp %103 : vector<2x256xf32>
    %cst_38 = arith.constant 1.000000e+00 : f32
    %105 = vector.broadcast %cst_38 : f32 to vector<2x256xf32>
    %106 = arith.addf %105, %104 : vector<2x256xf32>
    %107 = arith.divf %105, %106 : vector<2x256xf32>
    %108 = vector.extract_strided_slice %107 {offsets = [0, 0], sizes = [2, 64], strides = [1, 1]} : vector<2x256xf32> to vector<2x64xf32>
    %109 = vector.extract_strided_slice %107 {offsets = [0, 64], sizes = [2, 64], strides = [1, 1]} : vector<2x256xf32> to vector<2x64xf32>
    %110 = vector.extract_strided_slice %107 {offsets = [0, 128], sizes = [2, 64], strides = [1, 1]} : vector<2x256xf32> to vector<2x64xf32>
    %cst_39 = arith.constant 2.000000e+00 : f32
    %111 = vector.broadcast %cst_39 : f32 to vector<2x64xf32>
    %112 = arith.mulf %111, %110 : vector<2x64xf32>
    %cst_40 = arith.constant 1.000000e+00 : f32
    %113 = vector.broadcast %cst_40 : f32 to vector<2x64xf32>
    %114 = arith.subf %112, %113 : vector<2x64xf32>
    %115 = vector.extract_strided_slice %107 {offsets = [0, 192], sizes = [2, 64], strides = [1, 1]} : vector<2x256xf32> to vector<2x64xf32>
    %116 = arith.mulf %109, %92 : vector<2x64xf32>
    %117 = arith.mulf %108, %114 : vector<2x64xf32>
    %118 = arith.addf %116, %117 : vector<2x64xf32>
    %119 = math.tanh %118 : vector<2x64xf32>
    %120 = arith.mulf %115, %119 : vector<2x64xf32>
    %cst_41 = arith.constant 0.000000e+00 : f32
    %121 = vector.broadcast %cst_41 : f32 to vector<2x64xf32>
    %122 = arith.maximumf %120, %121 : vector<2x64xf32>
    %c0_42 = arith.constant 0 : index
    %c192 = arith.constant 192 : index
    %123 = vector.load %arg13[%c0_42, %c192] : memref<2x512xf32, #tpu.memory_space<vmem>>, vector<2x64xf32>
    tpu.vector_store %arg13[%c0_42, %c192], %122 {strides = array<i32>} : memref<2x512xf32, #tpu.memory_space<vmem>>, vector<2x64xf32>,
    %124 = vector.extract_strided_slice %16 {offsets = [4, 0, 0], sizes = [1, 2, 256], strides = [1, 1, 1]} : vector<8x2x256xf32> to vector<1x2x256xf32>
    %125 = vector.shape_cast %124 : vector<1x2x256xf32> to vector<2x256xf32>
    %126 = arith.truncf %120 : vector<2x64xf32> to vector<2x64xbf16>
    %cst_43 = arith.constant dense<0.000000e+00> : vector<2x256xf32>
    %127 = tpu.matmul %126, %17, %cst_43 {dimension_numbers = #tpu.dot_dimension_numbers<[1], [0], [0], [1], [0, 0, 1, 1], [], []>} : vector<2x64xbf16>, vector<64x256xbf16>, vector<2x256xf32> -> vector<2x256xf32>
    %128 = arith.addf %125, %127 : vector<2x256xf32>
    %129 = arith.negf %128 : vector<2x256xf32>
    %130 = math.exp %129 : vector<2x256xf32>
    %cst_44 = arith.constant 1.000000e+00 : f32
    %131 = vector.broadcast %cst_44 : f32 to vector<2x256xf32>
    %132 = arith.addf %131, %130 : vector<2x256xf32>
    %133 = arith.divf %131, %132 : vector<2x256xf32>
    %134 = vector.extract_strided_slice %133 {offsets = [0, 0], sizes = [2, 64], strides = [1, 1]} : vector<2x256xf32> to vector<2x64xf32>
    %135 = vector.extract_strided_slice %133 {offsets = [0, 64], sizes = [2, 64], strides = [1, 1]} : vector<2x256xf32> to vector<2x64xf32>
    %136 = vector.extract_strided_slice %133 {offsets = [0, 128], sizes = [2, 64], strides = [1, 1]} : vector<2x256xf32> to vector<2x64xf32>
    %cst_45 = arith.constant 2.000000e+00 : f32
    %137 = vector.broadcast %cst_45 : f32 to vector<2x64xf32>
    %138 = arith.mulf %137, %136 : vector<2x64xf32>
    %cst_46 = arith.constant 1.000000e+00 : f32
    %139 = vector.broadcast %cst_46 : f32 to vector<2x64xf32>
    %140 = arith.subf %138, %139 : vector<2x64xf32>
    %141 = vector.extract_strided_slice %133 {offsets = [0, 192], sizes = [2, 64], strides = [1, 1]} : vector<2x256xf32> to vector<2x64xf32>
    %142 = arith.mulf %135, %118 : vector<2x64xf32>
    %143 = arith.mulf %134, %140 : vector<2x64xf32>
    %144 = arith.addf %142, %143 : vector<2x64xf32>
    %145 = math.tanh %144 : vector<2x64xf32>
    %146 = arith.mulf %141, %145 : vector<2x64xf32>
    %cst_47 = arith.constant 0.000000e+00 : f32
    %147 = vector.broadcast %cst_47 : f32 to vector<2x64xf32>
    %148 = arith.maximumf %146, %147 : vector<2x64xf32>
    %c0_48 = arith.constant 0 : index
    %c256 = arith.constant 256 : index
    %149 = vector.load %arg13[%c0_48, %c256] : memref<2x512xf32, #tpu.memory_space<vmem>>, vector<2x64xf32>
    tpu.vector_store %arg13[%c0_48, %c256], %148 {strides = array<i32>} : memref<2x512xf32, #tpu.memory_space<vmem>>, vector<2x64xf32>,
    %150 = vector.extract_strided_slice %16 {offsets = [5, 0, 0], sizes = [1, 2, 256], strides = [1, 1, 1]} : vector<8x2x256xf32> to vector<1x2x256xf32>
    %151 = vector.shape_cast %150 : vector<1x2x256xf32> to vector<2x256xf32>
    %152 = arith.truncf %146 : vector<2x64xf32> to vector<2x64xbf16>
    %cst_49 = arith.constant dense<0.000000e+00> : vector<2x256xf32>
    %153 = tpu.matmul %152, %17, %cst_49 {dimension_numbers = #tpu.dot_dimension_numbers<[1], [0], [0], [1], [0, 0, 1, 1], [], []>} : vector<2x64xbf16>, vector<64x256xbf16>, vector<2x256xf32> -> vector<2x256xf32>
    %154 = arith.addf %151, %153 : vector<2x256xf32>
    %155 = arith.negf %154 : vector<2x256xf32>
    %156 = math.exp %155 : vector<2x256xf32>
    %cst_50 = arith.constant 1.000000e+00 : f32
    %157 = vector.broadcast %cst_50 : f32 to vector<2x256xf32>
    %158 = arith.addf %157, %156 : vector<2x256xf32>
    %159 = arith.divf %157, %158 : vector<2x256xf32>
    %160 = vector.extract_strided_slice %159 {offsets = [0, 0], sizes = [2, 64], strides = [1, 1]} : vector<2x256xf32> to vector<2x64xf32>
    %161 = vector.extract_strided_slice %159 {offsets = [0, 64], sizes = [2, 64], strides = [1, 1]} : vector<2x256xf32> to vector<2x64xf32>
    %162 = vector.extract_strided_slice %159 {offsets = [0, 128], sizes = [2, 64], strides = [1, 1]} : vector<2x256xf32> to vector<2x64xf32>
    %cst_51 = arith.constant 2.000000e+00 : f32
    %163 = vector.broadcast %cst_51 : f32 to vector<2x64xf32>
    %164 = arith.mulf %163, %162 : vector<2x64xf32>
    %cst_52 = arith.constant 1.000000e+00 : f32
    %165 = vector.broadcast %cst_52 : f32 to vector<2x64xf32>
    %166 = arith.subf %164, %165 : vector<2x64xf32>
    %167 = vector.extract_strided_slice %159 {offsets = [0, 192], sizes = [2, 64], strides = [1, 1]} : vector<2x256xf32> to vector<2x64xf32>
    %168 = arith.mulf %161, %144 : vector<2x64xf32>
    %169 = arith.mulf %160, %166 : vector<2x64xf32>
    %170 = arith.addf %168, %169 : vector<2x64xf32>
    %171 = math.tanh %170 : vector<2x64xf32>
    %172 = arith.mulf %167, %171 : vector<2x64xf32>
    %cst_53 = arith.constant 0.000000e+00 : f32
    %173 = vector.broadcast %cst_53 : f32 to vector<2x64xf32>
    %174 = arith.maximumf %172, %173 : vector<2x64xf32>
    %c0_54 = arith.constant 0 : index
    %c320 = arith.constant 320 : index
    %175 = vector.load %arg13[%c0_54, %c320] : memref<2x512xf32, #tpu.memory_space<vmem>>, vector<2x64xf32>
    tpu.vector_store %arg13[%c0_54, %c320], %174 {strides = array<i32>} : memref<2x512xf32, #tpu.memory_space<vmem>>, vector<2x64xf32>,
    %176 = vector.extract_strided_slice %16 {offsets = [6, 0, 0], sizes = [1, 2, 256], strides = [1, 1, 1]} : vector<8x2x256xf32> to vector<1x2x256xf32>
    %177 = vector.shape_cast %176 : vector<1x2x256xf32> to vector<2x256xf32>
    %178 = arith.truncf %172 : vector<2x64xf32> to vector<2x64xbf16>
    %cst_55 = arith.constant dense<0.000000e+00> : vector<2x256xf32>
    %179 = tpu.matmul %178, %17, %cst_55 {dimension_numbers = #tpu.dot_dimension_numbers<[1], [0], [0], [1], [0, 0, 1, 1], [], []>} : vector<2x64xbf16>, vector<64x256xbf16>, vector<2x256xf32> -> vector<2x256xf32>
    %180 = arith.addf %177, %179 : vector<2x256xf32>
    %181 = arith.negf %180 : vector<2x256xf32>
    %182 = math.exp %181 : vector<2x256xf32>
    %cst_56 = arith.constant 1.000000e+00 : f32
    %183 = vector.broadcast %cst_56 : f32 to vector<2x256xf32>
    %184 = arith.addf %183, %182 : vector<2x256xf32>
    %185 = arith.divf %183, %184 : vector<2x256xf32>
    %186 = vector.extract_strided_slice %185 {offsets = [0, 0], sizes = [2, 64], strides = [1, 1]} : vector<2x256xf32> to vector<2x64xf32>
    %187 = vector.extract_strided_slice %185 {offsets = [0, 64], sizes = [2, 64], strides = [1, 1]} : vector<2x256xf32> to vector<2x64xf32>
    %188 = vector.extract_strided_slice %185 {offsets = [0, 128], sizes = [2, 64], strides = [1, 1]} : vector<2x256xf32> to vector<2x64xf32>
    %cst_57 = arith.constant 2.000000e+00 : f32
    %189 = vector.broadcast %cst_57 : f32 to vector<2x64xf32>
    %190 = arith.mulf %189, %188 : vector<2x64xf32>
    %cst_58 = arith.constant 1.000000e+00 : f32
    %191 = vector.broadcast %cst_58 : f32 to vector<2x64xf32>
    %192 = arith.subf %190, %191 : vector<2x64xf32>
    %193 = vector.extract_strided_slice %185 {offsets = [0, 192], sizes = [2, 64], strides = [1, 1]} : vector<2x256xf32> to vector<2x64xf32>
    %194 = arith.mulf %187, %170 : vector<2x64xf32>
    %195 = arith.mulf %186, %192 : vector<2x64xf32>
    %196 = arith.addf %194, %195 : vector<2x64xf32>
    %197 = math.tanh %196 : vector<2x64xf32>
    %198 = arith.mulf %193, %197 : vector<2x64xf32>
    %cst_59 = arith.constant 0.000000e+00 : f32
    %199 = vector.broadcast %cst_59 : f32 to vector<2x64xf32>
    %200 = arith.maximumf %198, %199 : vector<2x64xf32>
    %c0_60 = arith.constant 0 : index
    %c384 = arith.constant 384 : index
    %201 = vector.load %arg13[%c0_60, %c384] : memref<2x512xf32, #tpu.memory_space<vmem>>, vector<2x64xf32>
    tpu.vector_store %arg13[%c0_60, %c384], %200 {strides = array<i32>} : memref<2x512xf32, #tpu.memory_space<vmem>>, vector<2x64xf32>,
    %202 = vector.extract_strided_slice %16 {offsets = [7, 0, 0], sizes = [1, 2, 256], strides = [1, 1, 1]} : vector<8x2x256xf32> to vector<1x2x256xf32>
    %203 = vector.shape_cast %202 : vector<1x2x256xf32> to vector<2x256xf32>
    %204 = arith.truncf %198 : vector<2x64xf32> to vector<2x64xbf16>
    %cst_61 = arith.constant dense<0.000000e+00> : vector<2x256xf32>
    %205 = tpu.matmul %204, %17, %cst_61 {dimension_numbers = #tpu.dot_dimension_numbers<[1], [0], [0], [1], [0, 0, 1, 1], [], []>} : vector<2x64xbf16>, vector<64x256xbf16>, vector<2x256xf32> -> vector<2x256xf32>
    %206 = arith.addf %203, %205 : vector<2x256xf32>
    %207 = arith.negf %206 : vector<2x256xf32>
    %208 = math.exp %207 : vector<2x256xf32>
    %cst_62 = arith.constant 1.000000e+00 : f32
    %209 = vector.broadcast %cst_62 : f32 to vector<2x256xf32>
    %210 = arith.addf %209, %208 : vector<2x256xf32>
    %211 = arith.divf %209, %210 : vector<2x256xf32>
    %212 = vector.extract_strided_slice %211 {offsets = [0, 0], sizes = [2, 64], strides = [1, 1]} : vector<2x256xf32> to vector<2x64xf32>
    %213 = vector.extract_strided_slice %211 {offsets = [0, 64], sizes = [2, 64], strides = [1, 1]} : vector<2x256xf32> to vector<2x64xf32>
    %214 = vector.extract_strided_slice %211 {offsets = [0, 128], sizes = [2, 64], strides = [1, 1]} : vector<2x256xf32> to vector<2x64xf32>
    %cst_63 = arith.constant 2.000000e+00 : f32
    %215 = vector.broadcast %cst_63 : f32 to vector<2x64xf32>
    %216 = arith.mulf %215, %214 : vector<2x64xf32>
    %cst_64 = arith.constant 1.000000e+00 : f32
    %217 = vector.broadcast %cst_64 : f32 to vector<2x64xf32>
    %218 = arith.subf %216, %217 : vector<2x64xf32>
    %219 = vector.extract_strided_slice %211 {offsets = [0, 192], sizes = [2, 64], strides = [1, 1]} : vector<2x256xf32> to vector<2x64xf32>
    %220 = arith.mulf %213, %196 : vector<2x64xf32>
    %221 = arith.mulf %212, %218 : vector<2x64xf32>
    %222 = arith.addf %220, %221 : vector<2x64xf32>
    %223 = math.tanh %222 : vector<2x64xf32>
    %224 = arith.mulf %219, %223 : vector<2x64xf32>
    %cst_65 = arith.constant 0.000000e+00 : f32
    %225 = vector.broadcast %cst_65 : f32 to vector<2x64xf32>
    %226 = arith.maximumf %224, %225 : vector<2x64xf32>
    %c0_66 = arith.constant 0 : index
    %c448 = arith.constant 448 : index
    %227 = vector.load %arg13[%c0_66, %c448] : memref<2x512xf32, #tpu.memory_space<vmem>>, vector<2x64xf32>
    tpu.vector_store %arg13[%c0_66, %c448], %226 {strides = array<i32>} : memref<2x512xf32, #tpu.memory_space<vmem>>, vector<2x64xf32>,
    %c0_67 = arith.constant 0 : index
    %c0_68 = arith.constant 0 : index
    %228 = vector.load %arg13[%c0_67, %c0_68] : memref<2x512xf32, #tpu.memory_space<vmem>>, vector<2x512xf32>
    %229 = arith.truncf %228 : vector<2x512xf32> to vector<2x512xbf16>
    %c0_69 = arith.constant 0 : index
    %c0_70 = arith.constant 0 : index
    %230 = vector.load %arg9[%c0_69, %c0_70] : memref<512x128xbf16, #tpu.memory_space<vmem>>, vector<512x128xbf16>
    %cst_71 = arith.constant dense<0.000000e+00> : vector<2x128xf32>
    %231 = tpu.matmul %229, %230, %cst_71 {dimension_numbers = #tpu.dot_dimension_numbers<[1], [0], [0], [1], [0, 0, 1, 1], [], []>} : vector<2x512xbf16>, vector<512x128xbf16>, vector<2x128xf32> -> vector<2x128xf32>
    %c0_72 = arith.constant 0 : index
    %c0_73 = arith.constant 0 : index
    %232 = vector.load %arg10[%c0_72, %c0_73] : memref<1x128xf32, #tpu.memory_space<vmem>>, vector<1x128xf32>
    %233 = vector.broadcast %232 : vector<1x128xf32> to vector<2x128xf32>
    %234 = arith.addf %231, %233 : vector<2x128xf32>
    %c0_74 = arith.constant 0 : index
    %c0_75 = arith.constant 0 : index
    %235 = vector.load %arg11[%c0_74, %c0_75] : memref<2x128xf32, #tpu.memory_space<vmem>>, vector<2x128xf32>
    tpu.vector_store %arg11[%c0_74, %c0_75], %234 {strides = array<i32>} : memref<2x128xf32, #tpu.memory_space<vmem>>, vector<2x128xf32>,
    %236 = tpu.concatenate %224, %222 in 1 : vector<2x64xf32>, vector<2x64xf32> -> vector<2x128xf32>
    %c0_76 = arith.constant 0 : index
    %c0_77 = arith.constant 0 : index
    %237 = vector.load %arg12[%c0_76, %c0_77] : memref<2x128xf32, #tpu.memory_space<vmem>>, vector<2x128xf32>
    tpu.vector_store %arg12[%c0_76, %c0_77], %236 {strides = array<i32>} : memref<2x128xf32, #tpu.memory_space<vmem>>, vector<2x128xf32>,
    return
  }
  func.func @transform_0(%arg0: i32) -> (i32, i32, i32) {
    %c0_i32 = arith.constant 0 : i32
    %c0_i32_0 = arith.constant 0 : i32
    %c0_i32_1 = arith.constant 0 : i32
    return %c0_i32, %arg0, %c0_i32_0 : i32, i32, i32
  }
  func.func @transform_1(%arg0: i32) -> (i32, i32) {
    %c0_i32 = arith.constant 0 : i32
    %c0_i32_0 = arith.constant 0 : i32
    return %arg0, %c0_i32 : i32, i32
  }
  func.func @transform_2(%arg0: i32) -> (i32, i32) {
    %c0_i32 = arith.constant 0 : i32
    %c0_i32_0 = arith.constant 0 : i32
    return %arg0, %c0_i32 : i32, i32
  }
  func.func @transform_3(%arg0: i32) -> (i32, i32) {
    %c0_i32 = arith.constant 0 : i32
    %c0_i32_0 = arith.constant 0 : i32
    %c0_i32_1 = arith.constant 0 : i32
    return %c0_i32, %c0_i32_0 : i32, i32
  }
  func.func @transform_4(%arg0: i32) -> (i32, i32) {
    %c0_i32 = arith.constant 0 : i32
    %c0_i32_0 = arith.constant 0 : i32
    %c0_i32_1 = arith.constant 0 : i32
    return %c0_i32, %c0_i32_0 : i32, i32
  }
  func.func @transform_5(%arg0: i32) -> (i32, i32) {
    %c0_i32 = arith.constant 0 : i32
    %c0_i32_0 = arith.constant 0 : i32
    %c0_i32_1 = arith.constant 0 : i32
    return %c0_i32, %c0_i32_0 : i32, i32
  }
  func.func @transform_6(%arg0: i32) -> (i32, i32) {
    %c0_i32 = arith.constant 0 : i32
    %c0_i32_0 = arith.constant 0 : i32
    %c0_i32_1 = arith.constant 0 : i32
    return %c0_i32, %c0_i32_0 : i32, i32
  }
  func.func @transform_7(%arg0: i32) -> (i32, i32) {
    %c0_i32 = arith.constant 0 : i32
    %c0_i32_0 = arith.constant 0 : i32
    %c0_i32_1 = arith.constant 0 : i32
    return %c0_i32, %c0_i32_0 : i32, i32
  }
  func.func @transform_8(%arg0: i32) -> (i32, i32) {
    %c0_i32 = arith.constant 0 : i32
    %c0_i32_0 = arith.constant 0 : i32
    %c0_i32_1 = arith.constant 0 : i32
    return %c0_i32, %c0_i32_0 : i32, i32
  }
  func.func @transform_9(%arg0: i32) -> (i32, i32) {
    %c0_i32 = arith.constant 0 : i32
    %c0_i32_0 = arith.constant 0 : i32
    %c0_i32_1 = arith.constant 0 : i32
    return %c0_i32, %c0_i32_0 : i32, i32
  }
  func.func @transform_10(%arg0: i32) -> (i32, i32) {
    %c0_i32 = arith.constant 0 : i32
    %c0_i32_0 = arith.constant 0 : i32
    return %arg0, %c0_i32 : i32, i32
  }
  func.func @transform_11(%arg0: i32) -> (i32, i32) {
    %c0_i32 = arith.constant 0 : i32
    %c0_i32_0 = arith.constant 0 : i32
    return %arg0, %c0_i32 : i32, i32
  }
}

</mosaic_0001>

<llo_original>
// kernel: tpu_custom_call.1
$region0: #{tpu_custom_call.1}
  #allocation0 [shape = 'u32[]', space=smem, size = 0x4, offset = 0x4, fixed_abs, tag = 'smem constant byte address 0x4 - core index']
  #allocation1 [shape = 'u32[144,128]{1,0:T(1,128)}', space=vmem, size = 0x12000, scoped, tag = 'internal scratch']
  #allocation2 [shape = 'f32[2,512]{1,0:T(2,128)}', space=vmem, size = 0x1000, scoped, tag = 'scratch operand']
  %s0 = inlined_call_operand.vmem [shape: f32[8,2,4], index: 0, kind: input, shape index: {}]
  %s1 = inlined_call_operand.vmem [shape: f32[2,64], index: 1, kind: input, shape index: {}]
  %s2 = inlined_call_operand.vmem [shape: f32[2,64], index: 2, kind: input, shape index: {}]
  %s3 = inlined_call_operand.vmem [shape: bf16[4,64], index: 3, kind: input, shape index: {}]
  %s4 = inlined_call_operand.vmem [shape: f32[1,64], index: 4, kind: input, shape index: {}]
  %s5 = inlined_call_operand.hbm [shape: bf16[64,256], index: 5, kind: input, shape index: {}]
  %s6 = inlined_call_operand.hbm [shape: bf16[64,256], index: 6, kind: input, shape index: {}]
  %s7 = inlined_call_operand.vmem [shape: f32[1,256], index: 7, kind: input, shape index: {}]
  %s8 = inlined_call_operand.hbm [shape: bf16[512,128], index: 8, kind: input, shape index: {}]
  %s9 = inlined_call_operand.vmem [shape: f32[1,128], index: 9, kind: input, shape index: {}]
  %s10 = inlined_call_operand.hbm [shape: f32[2,128], index: 10, kind: output, shape index: {0}]
  %s11 = inlined_call_operand.hbm [shape: f32[2,128], index: 11, kind: output, shape index: {1}]
  %12 = xla_tuple %s10, %s11
  %s13 = sld [smem:[#allocation0]]
  $region70: #{tpu_custom_call.1} parent=0
    _
  %s15 = ssub.s32 1, %s13
  %s16 = scalar_select 0, %s15, %s13
  $region1: #{tpu_custom_call.1} parent=0
    #allocation3 [shape = 'u8[32768]{0}', space=vmem, size = 0x8000, scoped, tag = 'input window, operand 5, single buffered']
    #allocation4 [shape = 's32[1]{0}', space=sflag, size = 0x4, scoped, tag = 'scoped memory for tpu_custom_call.1']
    #allocation5 [shape = 's32[1]{0}', space=sflag, size = 0x4, scoped, tag = 'scoped memory for tpu_custom_call.1']
    #allocation6 [shape = 'u8[32768]{0}', space=vmem, size = 0x8000, scoped, tag = 'input window, operand 6, single buffered']
    #allocation7 [shape = 's32[1]{0}', space=sflag, size = 0x4, scoped, tag = 'scoped memory for tpu_custom_call.1']
    #allocation8 [shape = 'u8[131072]{0}', space=vmem, size = 0x20000, scoped, tag = 'input window, operand 8, single buffered']
    #allocation9 [shape = 'u8[1024]{0}', space=vmem, size = 0x400, scoped, tag = 'output window, operand 0, single buffered']
    #allocation10 [shape = 'u8[1024]{0}', space=vmem, size = 0x400, scoped, tag = 'output window, operand 1, single buffered']
    #allocation11 [shape = 's32[1]{0}', space=sflag, size = 0x4, scoped, tag = 'scoped memory for tpu_custom_call.1']
    %17 = vsyncpa [#allocation4], 0
    %18 = vsyncpa [#allocation7], 0
    %19 = vsyncpa [#allocation5], 0
    %20 = vsyncpa [#allocation11], 0
    // Predicated region
    $region2: #{tpu_custom_call.1} parent=1 // pred_check
      _
    $region3: #{tpu_custom_call.1} parent=1 // pred_check_branch
      %22 = sbr.rel (0) target = $region5
    $region4: #{tpu_custom_call.1} parent=1 // pred_region
      _
    $region5: #{tpu_custom_call.1} parent=1 // pred_fallthru
      _
    // Predicated region
    $region6: #{tpu_custom_call.1} parent=1 // pred_check
      _
    $region7: #{tpu_custom_call.1} parent=1 // pred_check_branch
      %24 = sbr.rel (0) target = $region9
    $region8: #{tpu_custom_call.1} parent=1 // pred_region
      _
    $region9: #{tpu_custom_call.1} parent=1 // pred_fallthru
      _
    // Predicated region
    $region10: #{tpu_custom_call.1} parent=1 // pred_check
      _
    $region11: #{tpu_custom_call.1} parent=1 // pred_check_branch
      %26 = sbr.rel (0) target = $region13
    $region12: #{tpu_custom_call.1} parent=1 // pred_region
      _
    $region13: #{tpu_custom_call.1} parent=1 // pred_fallthru
      _
    // Predicated region
    $region14: #{tpu_custom_call.1} parent=1 // pred_check
      _
    $region15: #{tpu_custom_call.1} parent=1 // pred_check_branch
      %28 = sbr.rel (0) target = $region17
    $region16: #{tpu_custom_call.1} parent=1 // pred_region
      _
    $region17: #{tpu_custom_call.1} parent=1 // pred_fallthru
      _
    // Predicated region
    $region18: #{tpu_custom_call.1} parent=1 // pred_check
      _
    $region19: #{tpu_custom_call.1} parent=1 // pred_check_branch
      %30 = sbr.rel (0) target = $region21
    $region20: #{tpu_custom_call.1} parent=1 // pred_region
      _
    $region21: #{tpu_custom_call.1} parent=1 // pred_fallthru
      _
    // Predicated region
    $region22: #{tpu_custom_call.1} parent=1 // pred_check
      _
    $region23: #{tpu_custom_call.1} parent=1 // pred_check_branch
      %32 = sbr.rel (0) target = $region25
    $region24: #{tpu_custom_call.1} parent=1 // pred_region
      %s34 = ssub.s32 1024, 1024
      %35 = vsyncadd [#allocation4], %s34
      %s36 = sshll.u32 [#allocation3], 4
      %s37 = int_to_ptr.vmem [resolvable:$true] %s36
      %42 = dma.hbm_to_vmem [thread:$0]  %s5, 1024, %s37, [#allocation4], 128, 128, 8
    $region25: #{tpu_custom_call.1} parent=1 // pred_fallthru
      _
    // Predicated region
    $region26: #{tpu_custom_call.1} parent=1 // pred_check
      _
    $region27: #{tpu_custom_call.1} parent=1 // pred_check_branch
      %44 = sbr.rel (0) target = $region29
    $region28: #{tpu_custom_call.1} parent=1 // pred_region
      %s46 = ssub.s32 1024, 1024
      %47 = vsyncadd [#allocation7], %s46
      %s48 = sshll.u32 [#allocation6], 4
      %s49 = int_to_ptr.vmem [resolvable:$true] %s48
      %54 = dma.hbm_to_vmem [thread:$0]  %s6, 1024, %s49, [#allocation7], 128, 128, 8
    $region29: #{tpu_custom_call.1} parent=1 // pred_fallthru
      _
    // Predicated region
    $region30: #{tpu_custom_call.1} parent=1 // pred_check
      _
    $region31: #{tpu_custom_call.1} parent=1 // pred_check_branch
      %56 = sbr.rel (0) target = $region33
    $region32: #{tpu_custom_call.1} parent=1 // pred_region
      _
    $region33: #{tpu_custom_call.1} parent=1 // pred_fallthru
      _
    // Predicated region
    $region34: #{tpu_custom_call.1} parent=1 // pred_check
      _
    $region35: #{tpu_custom_call.1} parent=1 // pred_check_branch
      %58 = sbr.rel (0) target = $region37
    $region36: #{tpu_custom_call.1} parent=1 // pred_region
      %s60 = ssub.s32 4096, 4096
      %61 = vsyncadd [#allocation7], %s60
      %s62 = sshll.u32 [#allocation8], 4
      %s63 = int_to_ptr.vmem [resolvable:$true] %s62
      %68 = dma.hbm_to_vmem [thread:$0]  %s8, 4096, %s63, [#allocation7], 64, 64, 4
    $region37: #{tpu_custom_call.1} parent=1 // pred_fallthru
      _
    // Predicated region
    $region38: #{tpu_custom_call.1} parent=1 // pred_check
      _
    $region39: #{tpu_custom_call.1} parent=1 // pred_check_branch
      %70 = sbr.rel (0) target = $region41
    $region40: #{tpu_custom_call.1} parent=1 // pred_region
      _
    $region41: #{tpu_custom_call.1} parent=1 // pred_fallthru
      _
    // Predicated region
    $region42: #{tpu_custom_call.1} parent=1 // pred_check
      _
    $region43: #{tpu_custom_call.1} parent=1 // pred_check_branch
      %72 = sbr.rel (0) target = $region45
    $region44: #{tpu_custom_call.1} parent=1 // pred_region
      %73 = dma.done [#allocation4], 1024
    $region45: #{tpu_custom_call.1} parent=1 // pred_fallthru
      _
    // Predicated region
    $region46: #{tpu_custom_call.1} parent=1 // pred_check
      _
    $region47: #{tpu_custom_call.1} parent=1 // pred_check_branch
      %75 = sbr.rel (0) target = $region49
    $region48: #{tpu_custom_call.1} parent=1 // pred_region
      %76 = dma.done [#allocation7], 1024
    $region49: #{tpu_custom_call.1} parent=1 // pred_fallthru
      _
    // Predicated region
    $region50: #{tpu_custom_call.1} parent=1 // pred_check
      _
    $region51: #{tpu_custom_call.1} parent=1 // pred_check_branch
      %78 = sbr.rel (0) target = $region53
    $region52: #{tpu_custom_call.1} parent=1 // pred_region
      %79 = dma.done [#allocation7], 4096
    $region53: #{tpu_custom_call.1} parent=1 // pred_fallthru
      _
    %v81 = vld [vmem:[%s0] sm:$0x3]
    %v82 = vld [vmem:[%s0 + $0x2] sm:$0x3]
    %v83 = vld [vmem:[%s0 + $0x4] sm:$0x3]
    %v84 = vld [vmem:[%s0 + $0x6] sm:$0x3]
    %v85 = vld [vmem:[%s0 + $0x8] sm:$0x3]
    %v86 = vld [vmem:[%s0 + $0xa] sm:$0x3]
    %v87 = vld [vmem:[%s0 + $0xc] sm:$0x3]
    %v88 = vld [vmem:[%s0 + $0xe] sm:$0x3]
    %v97 = vcombine.low %v81, %v82
    %v98 = vcombine.low %v83, %v84
    %v100 = vunpack.c.l.s4 1983009808
    %v101 = vunpack.c.0.s8 %v100
    %v102 = vlaneseq
    %v103 = vshrl.u32 %v102, 7
    %v104 = vsub.s32 %v101, %v103
    %v105 = vrot.slane %v97, %v104
    %v107 = vunpack.c.l.s4 1983009808
    %v108 = vunpack.c.0.s8 %v107
    %v109 = vlaneseq
    %v110 = vshrl.u32 %v109, 7
    %v111 = vsub.s32 %v108, %v110
    %v112 = vrot.slane %v98, %v111
    %v113 = vcombine.low %v105, %v112
    %v114 = vcombine.low %v85, %v86
    %v115 = vcombine.low %v87, %v88
    %v117 = vunpack.c.l.s4 1983009808
    %v118 = vunpack.c.0.s8 %v117
    %v119 = vlaneseq
    %v120 = vshrl.u32 %v119, 7
    %v121 = vsub.s32 %v118, %v120
    %v122 = vrot.slane %v114, %v121
    %v124 = vunpack.c.l.s4 1983009808
    %v125 = vunpack.c.0.s8 %v124
    %v126 = vlaneseq
    %v127 = vshrl.u32 %v126, 7
    %v128 = vsub.s32 %v125, %v127
    %v129 = vrot.slane %v115, %v128
    %v130 = vcombine.low %v122, %v129
    %v133 = vpack.c.bf16 %v130, %v113
    %v134 = vld [vmem:[%s3] sm:$0x3]
    %v135 = vld [vmem:[%s4] sm:$0x1]
    %v137 = vlaneseq
    %v138 = vshrl.u32 %v137, 7
    %v139 = vsub.s32 0, %v138
    %v140 = vrot.slane %v135, %v139
    %vm142 = vcmask 31744
    %v144 = vsel %vm142, %v133, 0
    %vm146 = vcmask 1041408
    %v148 = vsel %vm146, %v134, 0
    %150 = vmatprep.subr.bf16.mxu0 0
    %151 = vmatpush1.bf16.msra.mxu0 %v148
    %152 = vmatprep.subr.bf16.mxu0 0
    %153 = vmatpush1.bf16.msra.mxu0 0
    %154 = vmatprep.subr.bf16.mxu0 0
    %155 = vmatpush1.bf16.msra.mxu0 0
    %156 = vmatprep.subr.bf16.mxu0 0
    %157 = vmatpush1.bf16.msra.mxu0 0
    %158 = vmatprep.subr.bf16.mxu0 0
    %159 = vmatpush1.bf16.msra.mxu0 0
    %160 = vmatprep.subr.bf16.mxu0 0
    %161 = vmatpush1.bf16.msra.mxu0 0
    %162 = vmatprep.subr.bf16.mxu0 0
    %163 = vmatpush1.bf16.msra.mxu0 0
    %164 = vmatprep.subr.bf16.mxu0 0
    %165 = vmatpush1.bf16.msra.mxu0 0
    %166 = vmatprep.subr.bf16.mxu0 0
    %167 = vmatpush1.bf16.msra.mxu0 0
    %168 = vmatprep.subr.bf16.mxu0 0
    %169 = vmatpush1.bf16.msra.mxu0 0
    %170 = vmatprep.subr.bf16.mxu0 0
    %171 = vmatpush1.bf16.msra.mxu0 0
    %172 = vmatprep.subr.bf16.mxu0 0
    %173 = vmatpush1.bf16.msra.mxu0 0
    %174 = vmatprep.subr.bf16.mxu0 0
    %175 = vmatpush1.bf16.msra.mxu0 0
    %176 = vmatprep.subr.bf16.mxu0 0
    %177 = vmatpush1.bf16.msra.mxu0 0
    %178 = vmatprep.subr.bf16.mxu0 0
    %179 = vmatpush1.bf16.msra.mxu0 0
    %180 = vmatprep.subr.bf16.mxu0 0
    %181 = vmatpush1.bf16.msra.mxu0 0
    %182 = vmatprep.mubr.bf16.mxu0 0
    %183 = vmatmul.mubr.bf16.gmra.mrb[0].mxu0 %v144
    %v184 = vpop.f32.mrb[0].mxu0
    %v185 = vadd.f32 %v140, %v184
    %v186 = vpop.f32.mrb[0].mxu0
    %v187 = vpop.f32.mrb[0].mxu0
    %v188 = vadd.f32 %v140, %v187
    %v189 = vpop.f32.mrb[0].mxu0
    %190 = vdwg.mxu0
    %v191 = vmax.f32 %v185, 0.0
    %v192 = vmax.f32 %v188, 0.0
    %v193 = vpack.c.bf16 %v192, %v191
    %v194 = vld [vmem:[#allocation3] sm:$0xff]
    %v195 = vld [vmem:[#allocation3 + $0x8] sm:$0xff]
    %v196 = vld [vmem:[#allocation3 + $0x10] sm:$0xff]
    %v197 = vld [vmem:[#allocation3 + $0x18] sm:$0xff]
    %v198 = vld [vmem:[#allocation3 + $0x20] sm:$0xff]
    %v199 = vld [vmem:[#allocation3 + $0x28] sm:$0xff]
    %v200 = vld [vmem:[#allocation3 + $0x30] sm:$0xff]
    %v201 = vld [vmem:[#allocation3 + $0x38] sm:$0xff]
    %v202 = vld [vmem:[%s7] sm:$0x3]
    %v204 = vlaneseq
    %v205 = vshrl.u32 %v204, 7
    %v206 = vsub.s32 0, %v205
    %v207 = vrot.slane %v202, %v206
    %v208 = vlaneseq
    %v209 = vshrl.u32 %v208, 7
    %v210 = vsub.s32 1, %v209
    %v211 = vrot.slane %v202, %v210
    %v222 = vunpack.c.l.b16 %v194
    %v223 = vunpack.c.h.b16 %v194
    %v224 = vunpack.c.l.b16 %v195
    %v225 = vunpack.c.h.b16 %v195
    %v226 = vunpack.c.l.b16 %v196
    %v227 = vunpack.c.h.b16 %v196
    %v228 = vunpack.c.l.b16 %v197
    %v229 = vunpack.c.h.b16 %v197
    %v230 = vunpack.c.l.b16 %v198
    %v231 = vunpack.c.h.b16 %v198
    %v232 = vunpack.c.l.b16 %v199
    %v233 = vunpack.c.h.b16 %v199
    %v234 = vunpack.c.l.b16 %v200
    %v235 = vunpack.c.h.b16 %v200
    %v236 = vunpack.c.l.b16 %v201
    %v237 = vunpack.c.h.b16 %v201
    %v238 = vpack.c.b16 %v224, %v222
    %v239 = vpack.c.b16 %v225, %v223
    %v240 = vpack.c.b16 %v228, %v226
    %v241 = vpack.c.b16 %v229, %v227
    %v242 = vpack.c.b16 %v232, %v230
    %v243 = vpack.c.b16 %v233, %v231
    %v244 = vpack.c.b16 %v236, %v234
    %v245 = vpack.c.b16 %v237, %v235
    %vm254 = vcmask 523264
    %v256 = vsel %vm254, %v193, 0
    %258 = vmatprep.subr.bf16.mxu0 %v239
    %259 = vmatpush1.bf16.msra.mxu0 %v238
    %260 = vmatprep.subr.bf16.mxu0 %v241
    %261 = vmatpush1.bf16.msra.mxu0 %v240
    %262 = vmatprep.subr.bf16.mxu0 %v243
    %263 = vmatpush1.bf16.msra.mxu0 %v242
    %264 = vmatprep.subr.bf16.mxu0 %v245
    %265 = vmatpush1.bf16.msra.mxu0 %v244
    %266 = vmatprep.subr.bf16.mxu0 0
    %267 = vmatpush1.bf16.msra.mxu0 0
    %268 = vmatprep.subr.bf16.mxu0 0
    %269 = vmatpush1.bf16.msra.mxu0 0
    %270 = vmatprep.subr.bf16.mxu0 0
    %271 = vmatpush1.bf16.msra.mxu0 0
    %272 = vmatprep.subr.bf16.mxu0 0
    %273 = vmatpush1.bf16.msra.mxu0 0
    %274 = vmatprep.subr.bf16.mxu0 0
    %275 = vmatpush1.bf16.msra.mxu0 0
    %276 = vmatprep.subr.bf16.mxu0 0
    %277 = vmatpush1.bf16.msra.mxu0 0
    %278 = vmatprep.subr.bf16.mxu0 0
    %279 = vmatpush1.bf16.msra.mxu0 0
    %280 = vmatprep.subr.bf16.mxu0 0
    %281 = vmatpush1.bf16.msra.mxu0 0
    %282 = vmatprep.subr.bf16.mxu0 0
    %283 = vmatpush1.bf16.msra.mxu0 0
    %284 = vmatprep.subr.bf16.mxu0 0
    %285 = vmatpush1.bf16.msra.mxu0 0
    %286 = vmatprep.subr.bf16.mxu0 0
    %287 = vmatpush1.bf16.msra.mxu0 0
    %288 = vmatprep.subr.bf16.mxu0 0
    %289 = vmatpush1.bf16.msra.mxu0 0
    %290 = vmatprep.mubr.bf16.mxu0 0
    %291 = vmatmul.mubr.bf16.gmra.mrb[0].mxu0 %v256
    %v292 = vpop.f32.mrb[0].mxu0
    %v293 = vadd.f32 %v207, %v292
    %v294 = vpop.f32.mrb[0].mxu0
    %v295 = vadd.f32 %v211, %v294
    %v296 = vpop.f32.mrb[0].mxu0
    %v297 = vadd.f32 %v207, %v296
    %v298 = vpop.f32.mrb[0].mxu0
    %v299 = vadd.f32 %v211, %v298
    %300 = vdwg.mxu0
    %v305 = vcombine.low %v293, %v295
    %v306 = vcombine.high %v293, %v295
    %v308 = vunpack.c.l.s4 1983009808
    %v309 = vunpack.c.0.s8 %v308
    %v310 = vlaneseq
    %v311 = vshrl.u32 %v310, 7
    %v312 = vsub.s32 %v309, %v311
    %v313 = vrot.slane %v305, %v312
    %v315 = vunpack.c.l.s4 1983009808
    %v316 = vunpack.c.0.s8 %v315
    %v317 = vlaneseq
    %v318 = vshrl.u32 %v317, 7
    %v319 = vsub.s32 %v316, %v318
    %v320 = vrot.slane %v306, %v319
    %v321 = vcombine.high %v313, %v313
    %v322 = vcombine.high %v320, %v320
    %v323 = vcombine.low %v297, %v299
    %v324 = vcombine.high %v297, %v299
    %v326 = vunpack.c.l.s4 1983009808
    %v327 = vunpack.c.0.s8 %v326
    %v328 = vlaneseq
    %v329 = vshrl.u32 %v328, 7
    %v330 = vsub.s32 %v327, %v329
    %v331 = vrot.slane %v323, %v330
    %v333 = vunpack.c.l.s4 1983009808
    %v334 = vunpack.c.0.s8 %v333
    %v335 = vlaneseq
    %v336 = vshrl.u32 %v335, 7
    %v337 = vsub.s32 %v334, %v336
    %v338 = vrot.slane %v324, %v337
    %v339 = vcombine.high %v331, %v331
    %v340 = vcombine.high %v338, %v338
    %v349 = vld [vmem:[#allocation6] sm:$0xff]
    %v350 = vld [vmem:[#allocation6 + $0x8] sm:$0xff]
    %v351 = vld [vmem:[#allocation6 + $0x10] sm:$0xff]
    %v352 = vld [vmem:[#allocation6 + $0x18] sm:$0xff]
    %v353 = vld [vmem:[#allocation6 + $0x20] sm:$0xff]
    %v354 = vld [vmem:[#allocation6 + $0x28] sm:$0xff]
    %v355 = vld [vmem:[#allocation6 + $0x30] sm:$0xff]
    %v356 = vld [vmem:[#allocation6 + $0x38] sm:$0xff]
    %v357 = vld [vmem:[%s1] sm:$0x3]
    %v358 = vld [vmem:[%s2] sm:$0x3]
    %v359 = vpack.c.bf16 %v357, %v357
    %v368 = vunpack.c.l.b16 %v349
    %v369 = vunpack.c.h.b16 %v349
    %v370 = vunpack.c.l.b16 %v350
    %v371 = vunpack.c.h.b16 %v350
    %v372 = vunpack.c.l.b16 %v351
    %v373 = vunpack.c.h.b16 %v351
    %v374 = vunpack.c.l.b16 %v352
    %v375 = vunpack.c.h.b16 %v352
    %v376 = vunpack.c.l.b16 %v353
    %v377 = vunpack.c.h.b16 %v353
    %v378 = vunpack.c.l.b16 %v354
    %v379 = vunpack.c.h.b16 %v354
    %v380 = vunpack.c.l.b16 %v355
    %v381 = vunpack.c.h.b16 %v355
    %v382 = vunpack.c.l.b16 %v356
    %v383 = vunpack.c.h.b16 %v356
    %v384 = vpack.c.b16 %v370, %v368
    %v385 = vpack.c.b16 %v371, %v369
    %v386 = vpack.c.b16 %v374, %v372
    %v387 = vpack.c.b16 %v375, %v373
    %v388 = vpack.c.b16 %v378, %v376
    %v389 = vpack.c.b16 %v379, %v377
    %v390 = vpack.c.b16 %v382, %v380
    %v391 = vpack.c.b16 %v383, %v381
    %v401 = vsel %vm254, %v359, 0
    %403 = vmatprep.subr.bf16.mxu0 %v385
    %404 = vmatpush1.bf16.msra.mxu0 %v384
    %405 = vmatprep.subr.bf16.mxu0 %v387
    %406 = vmatpush1.bf16.msra.mxu0 %v386
    %407 = vmatprep.subr.bf16.mxu0 %v389
    %408 = vmatpush1.bf16.msra.mxu0 %v388
    %409 = vmatprep.subr.bf16.mxu0 %v391
    %410 = vmatpush1.bf16.msra.mxu0 %v390
    %411 = vmatprep.subr.bf16.mxu0 0
    %412 = vmatpush1.bf16.msra.mxu0 0
    %413 = vmatprep.subr.bf16.mxu0 0
    %414 = vmatpush1.bf16.msra.mxu0 0
    %415 = vmatprep.subr.bf16.mxu0 0
    %416 = vmatpush1.bf16.msra.mxu0 0
    %417 = vmatprep.subr.bf16.mxu0 0
    %418 = vmatpush1.bf16.msra.mxu0 0
    %419 = vmatprep.subr.bf16.mxu0 0
    %420 = vmatpush1.bf16.msra.mxu0 0
    %421 = vmatprep.subr.bf16.mxu0 0
    %422 = vmatpush1.bf16.msra.mxu0 0
    %423 = vmatprep.subr.bf16.mxu0 0
    %424 = vmatpush1.bf16.msra.mxu0 0
    %425 = vmatprep.subr.bf16.mxu0 0
    %426 = vmatpush1.bf16.msra.mxu0 0
    %427 = vmatprep.subr.bf16.mxu0 0
    %428 = vmatpush1.bf16.msra.mxu0 0
    %429 = vmatprep.subr.bf16.mxu0 0
    %430 = vmatpush1.bf16.msra.mxu0 0
    %431 = vmatprep.subr.bf16.mxu0 0
    %432 = vmatpush1.bf16.msra.mxu0 0
    %433 = vmatprep.subr.bf16.mxu0 0
    %434 = vmatpush1.bf16.msra.mxu0 0
    %435 = vmatprep.mubr.bf16.mxu0 0
    %436 = vmatmul.mubr.bf16.gmra.mrb[0].mxu0 %v401
    %v437 = vpop.f32.mrb[0].mxu0
    %v438 = vadd.f32 0.0, %v437
    %v439 = vpop.f32.mrb[0].mxu0
    %v440 = vadd.f32 0.0, %v439
    %v441 = vpop.f32.mrb[0].mxu0
    %v442 = vpop.f32.mrb[0].mxu0
    %443 = vdwg.mxu0
    %v446 = vcombine.low %v438, %v440
    %v448 = vunpack.c.l.s4 1983009808
    %v449 = vunpack.c.0.s8 %v448
    %v450 = vlaneseq
    %v451 = vshrl.u32 %v450, 7
    %v452 = vsub.s32 %v449, %v451
    %v453 = vrot.slane %v446, %v452
    %v455 = vadd.f32 %v313, %v453
    %v456 = vxor.u32 %v455, 2147483648
    %v457 = vmul.f32 %v456, 1.442695
    %v458 = vpow.pop %v457
    %v459 = vadd.f32 %v458, 1.0
    %v460 = vrcp.pop %v459
    %v461 = vmul.f32 1.0, %v460
    %v463 = vrot.slane %v461, 2
    %v465 = vmul.f32 %v463, 2.0
    %v466 = vsub.f32 %v465, 1.0
    %v469 = vunpack.c.l.s4 1983009808
    %v470 = vunpack.c.0.s8 %v469
    %v471 = vlaneseq
    %v472 = vshrl.u32 %v471, 7
    %v473 = vsub.s32 %v470, %v472
    %v474 = vrot.slane %v358, %v473
    %475 = vrot.lane.b32.xlu0 %v474, 64
    %v476 = vpop.permute.xlu0 %475
    %v478 = vmul.f32 %v461, %v476
    %v479 = vmul.f32 %v461, %v466
    %481 = vrot.lane.b32.xlu0 %v479, 64
    %v482 = vpop.permute.xlu0 %481
    %v484 = vadd.f32 %v478, %v482
    %v485 = vtanh.pop %v484
    %486 = vrot.lane.b32.xlu0 %v461, 64
    %v487 = vpop.permute.xlu0 %486
    %v488 = vrot.slane %v487, 2
    %491 = vrot.lane.b32.xlu0 %v485, 64
    %v492 = vpop.permute.xlu0 %491
    %v494 = vmul.f32 %v488, %v492
    %v495 = vmax.f32 %v494, 0.0
    %vm496 = vcmask 517120
    %497 = vst.msk [vmem:[#allocation2] sm:$0x3] %vm496, %v495
    %v498 = vpack.c.bf16 %v494, %v494
    %v500 = vsel %vm254, %v498, 0
    %502 = vmatprep.subr.bf16.mxu0 %v385
    %503 = vmatpush1.bf16.msra.mxu0 %v384
    %504 = vmatprep.subr.bf16.mxu0 %v387
    %505 = vmatpush1.bf16.msra.mxu0 %v386
    %506 = vmatprep.subr.bf16.mxu0 %v389
    %507 = vmatpush1.bf16.msra.mxu0 %v388
    %508 = vmatprep.subr.bf16.mxu0 %v391
    %509 = vmatpush1.bf16.msra.mxu0 %v390
    %510 = vmatprep.subr.bf16.mxu0 0
    %511 = vmatpush1.bf16.msra.mxu0 0
    %512 = vmatprep.subr.bf16.mxu0 0
    %513 = vmatpush1.bf16.msra.mxu0 0
    %514 = vmatprep.subr.bf16.mxu0 0
    %515 = vmatpush1.bf16.msra.mxu0 0
    %516 = vmatprep.subr.bf16.mxu0 0
    %517 = vmatpush1.bf16.msra.mxu0 0
    %518 = vmatprep.subr.bf16.mxu0 0
    %519 = vmatpush1.bf16.msra.mxu0 0
    %520 = vmatprep.subr.bf16.mxu0 0
    %521 = vmatpush1.bf16.msra.mxu0 0
    %522 = vmatprep.subr.bf16.mxu0 0
    %523 = vmatpush1.bf16.msra.mxu0 0
    %524 = vmatprep.subr.bf16.mxu0 0
    %525 = vmatpush1.bf16.msra.mxu0 0
    %526 = vmatprep.subr.bf16.mxu0 0
    %527 = vmatpush1.bf16.msra.mxu0 0
    %528 = vmatprep.subr.bf16.mxu0 0
    %529 = vmatpush1.bf16.msra.mxu0 0
    %530 = vmatprep.subr.bf16.mxu0 0
    %531 = vmatpush1.bf16.msra.mxu0 0
    %532 = vmatprep.subr.bf16.mxu0 0
    %533 = vmatpush1.bf16.msra.mxu0 0
    %534 = vmatprep.mubr.bf16.mxu0 0
    %535 = vmatmul.mubr.bf16.gmra.mrb[0].mxu0 %v500
    %v536 = vpop.f32.mrb[0].mxu0
    %v537 = vadd.f32 0.0, %v536
    %v538 = vpop.f32.mrb[0].mxu0
    %v539 = vadd.f32 0.0, %v538
    %v540 = vpop.f32.mrb[0].mxu0
    %v541 = vpop.f32.mrb[0].mxu0
    %542 = vdwg.mxu0
    %v545 = vcombine.low %v537, %v539
    %v547 = vunpack.c.l.s4 1983009808
    %v548 = vunpack.c.0.s8 %v547
    %v549 = vlaneseq
    %v550 = vshrl.u32 %v549, 7
    %v551 = vsub.s32 %v548, %v550
    %v552 = vrot.slane %v545, %v551
    %v554 = vadd.f32 %v321, %v552
    %v555 = vxor.u32 %v554, 2147483648
    %v556 = vmul.f32 %v555, 1.442695
    %v557 = vpow.pop %v556
    %v558 = vadd.f32 %v557, 1.0
    %v559 = vrcp.pop %v558
    %v560 = vmul.f32 1.0, %v559
    %v562 = vrot.slane %v560, 2
    %v564 = vmul.f32 %v562, 2.0
    %v565 = vsub.f32 %v564, 1.0
    %v566 = vmul.f32 %v560, %v484
    %v567 = vmul.f32 %v560, %v565
    %569 = vrot.lane.b32.xlu0 %v567, 64
    %v570 = vpop.permute.xlu0 %569
    %v572 = vadd.f32 %v566, %v570
    %v573 = vtanh.pop %v572
    %574 = vrot.lane.b32.xlu0 %v560, 64
    %v575 = vpop.permute.xlu0 %574
    %v576 = vrot.slane %v575, 2
    %579 = vrot.lane.b32.xlu0 %v573, 64
    %v580 = vpop.permute.xlu0 %579
    %v582 = vmul.f32 %v576, %v580
    %v583 = vmax.f32 %v582, 0.0
    %585 = vrot.lane.b32.xlu0 %v583, 64
    %v586 = vpop.permute.xlu0 %585
    %vm588 = vcmask 1041920
    %589 = vst.msk [vmem:[#allocation2] sm:$0x3] %vm588, %v586
    %v590 = vpack.c.bf16 %v582, %v582
    %v592 = vsel %vm254, %v590, 0
    %594 = vmatprep.subr.bf16.mxu0 %v385
    %595 = vmatpush1.bf16.msra.mxu0 %v384
    %596 = vmatprep.subr.bf16.mxu0 %v387
    %597 = vmatpush1.bf16.msra.mxu0 %v386
    %598 = vmatprep.subr.bf16.mxu0 %v389
    %599 = vmatpush1.bf16.msra.mxu0 %v388
    %600 = vmatprep.subr.bf16.mxu0 %v391
    %601 = vmatpush1.bf16.msra.mxu0 %v390
    %602 = vmatprep.subr.bf16.mxu0 0
    %603 = vmatpush1.bf16.msra.mxu0 0
    %604 = vmatprep.subr.bf16.mxu0 0
    %605 = vmatpush1.bf16.msra.mxu0 0
    %606 = vmatprep.subr.bf16.mxu0 0
    %607 = vmatpush1.bf16.msra.mxu0 0
    %608 = vmatprep.subr.bf16.mxu0 0
    %609 = vmatpush1.bf16.msra.mxu0 0
    %610 = vmatprep.subr.bf16.mxu0 0
    %611 = vmatpush1.bf16.msra.mxu0 0
    %612 = vmatprep.subr.bf16.mxu0 0
    %613 = vmatpush1.bf16.msra.mxu0 0
    %614 = vmatprep.subr.bf16.mxu0 0
    %615 = vmatpush1.bf16.msra.mxu0 0
    %616 = vmatprep.subr.bf16.mxu0 0
    %617 = vmatpush1.bf16.msra.mxu0 0
    %618 = vmatprep.subr.bf16.mxu0 0
    %619 = vmatpush1.bf16.msra.mxu0 0
    %620 = vmatprep.subr.bf16.mxu0 0
    %621 = vmatpush1.bf16.msra.mxu0 0
    %622 = vmatprep.subr.bf16.mxu0 0
    %623 = vmatpush1.bf16.msra.mxu0 0
    %624 = vmatprep.subr.bf16.mxu0 0
    %625 = vmatpush1.bf16.msra.mxu0 0
    %626 = vmatprep.mubr.bf16.mxu0 0
    %627 = vmatmul.mubr.bf16.gmra.mrb[0].mxu0 %v592
    %v628 = vpop.f32.mrb[0].mxu0
    %v629 = vadd.f32 0.0, %v628
    %v630 = vpop.f32.mrb[0].mxu0
    %v631 = vadd.f32 0.0, %v630
    %v632 = vpop.f32.mrb[0].mxu0
    %v633 = vpop.f32.mrb[0].mxu0
    %634 = vdwg.mxu0
    %v637 = vcombine.low %v629, %v631
    %v639 = vunpack.c.l.s4 1983009808
    %v640 = vunpack.c.0.s8 %v639
    %v641 = vlaneseq
    %v642 = vshrl.u32 %v641, 7
    %v643 = vsub.s32 %v640, %v642
    %v644 = vrot.slane %v637, %v643
    %v646 = vadd.f32 %v320, %v644
    %v647 = vxor.u32 %v646, 2147483648
    %v648 = vmul.f32 %v647, 1.442695
    %v649 = vpow.pop %v648
    %v650 = vadd.f32 %v649, 1.0
    %v651 = vrcp.pop %v650
    %v652 = vmul.f32 1.0, %v651
    %v654 = vrot.slane %v652, 2
    %v656 = vmul.f32 %v654, 2.0
    %v657 = vsub.f32 %v656, 1.0
    %v658 = vmul.f32 %v652, %v572
    %v659 = vmul.f32 %v652, %v657
    %661 = vrot.lane.b32.xlu0 %v659, 64
    %v662 = vpop.permute.xlu0 %661
    %v664 = vadd.f32 %v658, %v662
    %v665 = vtanh.pop %v664
    %666 = vrot.lane.b32.xlu0 %v652, 64
    %v667 = vpop.permute.xlu0 %666
    %v668 = vrot.slane %v667, 2
    %671 = vrot.lane.b32.xlu0 %v665, 64
    %v672 = vpop.permute.xlu0 %671
    %v674 = vmul.f32 %v668, %v672
    %v675 = vmax.f32 %v674, 0.0
    %676 = vst.msk [vmem:[#allocation2 + $0x2] sm:$0x3] %vm496, %v675
    %v677 = vpack.c.bf16 %v674, %v674
    %v679 = vsel %vm254, %v677, 0
    %681 = vmatprep.subr.bf16.mxu0 %v385
    %682 = vmatpush1.bf16.msra.mxu0 %v384
    %683 = vmatprep.subr.bf16.mxu0 %v387
    %684 = vmatpush1.bf16.msra.mxu0 %v386
    %685 = vmatprep.subr.bf16.mxu0 %v389
    %686 = vmatpush1.bf16.msra.mxu0 %v388
    %687 = vmatprep.subr.bf16.mxu0 %v391
    %688 = vmatpush1.bf16.msra.mxu0 %v390
    %689 = vmatprep.subr.bf16.mxu0 0
    %690 = vmatpush1.bf16.msra.mxu0 0
    %691 = vmatprep.subr.bf16.mxu0 0
    %692 = vmatpush1.bf16.msra.mxu0 0
    %693 = vmatprep.subr.bf16.mxu0 0
    %694 = vmatpush1.bf16.msra.mxu0 0
    %695 = vmatprep.subr.bf16.mxu0 0
    %696 = vmatpush1.bf16.msra.mxu0 0
    %697 = vmatprep.subr.bf16.mxu0 0
    %698 = vmatpush1.bf16.msra.mxu0 0
    %699 = vmatprep.subr.bf16.mxu0 0
    %700 = vmatpush1.bf16.msra.mxu0 0
    %701 = vmatprep.subr.bf16.mxu0 0
    %702 = vmatpush1.bf16.msra.mxu0 0
    %703 = vmatprep.subr.bf16.mxu0 0
    %704 = vmatpush1.bf16.msra.mxu0 0
    %705 = vmatprep.subr.bf16.mxu0 0
    %706 = vmatpush1.bf16.msra.mxu0 0
    %707 = vmatprep.subr.bf16.mxu0 0
    %708 = vmatpush1.bf16.msra.mxu0 0
    %709 = vmatprep.subr.bf16.mxu0 0
    %710 = vmatpush1.bf16.msra.mxu0 0
    %711 = vmatprep.subr.bf16.mxu0 0
    %712 = vmatpush1.bf16.msra.mxu0 0
    %713 = vmatprep.mubr.bf16.mxu0 0
    %714 = vmatmul.mubr.bf16.gmra.mrb[0].mxu0 %v679
    %v715 = vpop.f32.mrb[0].mxu0
    %v716 = vadd.f32 0.0, %v715
    %v717 = vpop.f32.mrb[0].mxu0
    %v718 = vadd.f32 0.0, %v717
    %v719 = vpop.f32.mrb[0].mxu0
    %v720 = vpop.f32.mrb[0].mxu0
    %721 = vdwg.mxu0
    %v724 = vcombine.low %v716, %v718
    %v726 = vunpack.c.l.s4 1983009808
    %v727 = vunpack.c.0.s8 %v726
    %v728 = vlaneseq
    %v729 = vshrl.u32 %v728, 7
    %v730 = vsub.s32 %v727, %v729
    %v731 = vrot.slane %v724, %v730
    %v733 = vadd.f32 %v322, %v731
    %v734 = vxor.u32 %v733, 2147483648
    %v735 = vmul.f32 %v734, 1.442695
    %v736 = vpow.pop %v735
    %v737 = vadd.f32 %v736, 1.0
    %v738 = vrcp.pop %v737
    %v739 = vmul.f32 1.0, %v738
    %v741 = vrot.slane %v739, 2
    %v743 = vmul.f32 %v741, 2.0
    %v744 = vsub.f32 %v743, 1.0
    %v745 = vmul.f32 %v739, %v664
    %v746 = vmul.f32 %v739, %v744
    %748 = vrot.lane.b32.xlu0 %v746, 64
    %v749 = vpop.permute.xlu0 %748
    %v751 = vadd.f32 %v745, %v749
    %v752 = vtanh.pop %v751
    %753 = vrot.lane.b32.xlu0 %v739, 64
    %v754 = vpop.permute.xlu0 %753
    %v755 = vrot.slane %v754, 2
    %758 = vrot.lane.b32.xlu0 %v752, 64
    %v759 = vpop.permute.xlu0 %758
    %v761 = vmul.f32 %v755, %v759
    %v762 = vmax.f32 %v761, 0.0
    %764 = vrot.lane.b32.xlu0 %v762, 64
    %v765 = vpop.permute.xlu0 %764
    %767 = vst.msk [vmem:[#allocation2 + $0x2] sm:$0x3] %vm588, %v765
    %v768 = vpack.c.bf16 %v761, %v761
    %v770 = vsel %vm254, %v768, 0
    %772 = vmatprep.subr.bf16.mxu0 %v385
    %773 = vmatpush1.bf16.msra.mxu0 %v384
    %774 = vmatprep.subr.bf16.mxu0 %v387
    %775 = vmatpush1.bf16.msra.mxu0 %v386
    %776 = vmatprep.subr.bf16.mxu0 %v389
    %777 = vmatpush1.bf16.msra.mxu0 %v388
    %778 = vmatprep.subr.bf16.mxu0 %v391
    %779 = vmatpush1.bf16.msra.mxu0 %v390
    %780 = vmatprep.subr.bf16.mxu0 0
    %781 = vmatpush1.bf16.msra.mxu0 0
    %782 = vmatprep.subr.bf16.mxu0 0
    %783 = vmatpush1.bf16.msra.mxu0 0
    %784 = vmatprep.subr.bf16.mxu0 0
    %785 = vmatpush1.bf16.msra.mxu0 0
    %786 = vmatprep.subr.bf16.mxu0 0
    %787 = vmatpush1.bf16.msra.mxu0 0
    %788 = vmatprep.subr.bf16.mxu0 0
    %789 = vmatpush1.bf16.msra.mxu0 0
    %790 = vmatprep.subr.bf16.mxu0 0
    %791 = vmatpush1.bf16.msra.mxu0 0
    %792 = vmatprep.subr.bf16.mxu0 0
    %793 = vmatpush1.bf16.msra.mxu0 0
    %794 = vmatprep.subr.bf16.mxu0 0
    %795 = vmatpush1.bf16.msra.mxu0 0
    %796 = vmatprep.subr.bf16.mxu0 0
    %797 = vmatpush1.bf16.msra.mxu0 0
    %798 = vmatprep.subr.bf16.mxu0 0
    %799 = vmatpush1.bf16.msra.mxu0 0
    %800 = vmatprep.subr.bf16.mxu0 0
    %801 = vmatpush1.bf16.msra.mxu0 0
    %802 = vmatprep.subr.bf16.mxu0 0
    %803 = vmatpush1.bf16.msra.mxu0 0
    %804 = vmatprep.mubr.bf16.mxu0 0
    %805 = vmatmul.mubr.bf16.gmra.mrb[0].mxu0 %v770
    %v806 = vpop.f32.mrb[0].mxu0
    %v807 = vadd.f32 0.0, %v806
    %v808 = vpop.f32.mrb[0].mxu0
    %v809 = vadd.f32 0.0, %v808
    %v810 = vpop.f32.mrb[0].mxu0
    %v811 = vpop.f32.mrb[0].mxu0
    %812 = vdwg.mxu0
    %v815 = vcombine.low %v807, %v809
    %v817 = vunpack.c.l.s4 1983009808
    %v818 = vunpack.c.0.s8 %v817
    %v819 = vlaneseq
    %v820 = vshrl.u32 %v819, 7
    %v821 = vsub.s32 %v818, %v820
    %v822 = vrot.slane %v815, %v821
    %v824 = vadd.f32 %v331, %v822
    %v825 = vxor.u32 %v824, 2147483648
    %v826 = vmul.f32 %v825, 1.442695
    %v827 = vpow.pop %v826
    %v828 = vadd.f32 %v827, 1.0
    %v829 = vrcp.pop %v828
    %v830 = vmul.f32 1.0, %v829
    %v832 = vrot.slane %v830, 2
    %v834 = vmul.f32 %v832, 2.0
    %v835 = vsub.f32 %v834, 1.0
    %v836 = vmul.f32 %v830, %v751
    %v837 = vmul.f32 %v830, %v835
    %839 = vrot.lane.b32.xlu0 %v837, 64
    %v840 = vpop.permute.xlu0 %839
    %v842 = vadd.f32 %v836, %v840
    %v843 = vtanh.pop %v842
    %844 = vrot.lane.b32.xlu0 %v830, 64
    %v845 = vpop.permute.xlu0 %844
    %v846 = vrot.slane %v845, 2
    %849 = vrot.lane.b32.xlu0 %v843, 64
    %v850 = vpop.permute.xlu0 %849
    %v852 = vmul.f32 %v846, %v850
    %v853 = vmax.f32 %v852, 0.0
    %854 = vst.msk [vmem:[#allocation2 + $0x4] sm:$0x3] %vm496, %v853
    %v855 = vpack.c.bf16 %v852, %v852
    %v857 = vsel %vm254, %v855, 0
    %859 = vmatprep.subr.bf16.mxu0 %v385
    %860 = vmatpush1.bf16.msra.mxu0 %v384
    %861 = vmatprep.subr.bf16.mxu0 %v387
    %862 = vmatpush1.bf16.msra.mxu0 %v386
    %863 = vmatprep.subr.bf16.mxu0 %v389
    %864 = vmatpush1.bf16.msra.mxu0 %v388
    %865 = vmatprep.subr.bf16.mxu0 %v391
    %866 = vmatpush1.bf16.msra.mxu0 %v390
    %867 = vmatprep.subr.bf16.mxu0 0
    %868 = vmatpush1.bf16.msra.mxu0 0
    %869 = vmatprep.subr.bf16.mxu0 0
    %870 = vmatpush1.bf16.msra.mxu0 0
    %871 = vmatprep.subr.bf16.mxu0 0
    %872 = vmatpush1.bf16.msra.mxu0 0
    %873 = vmatprep.subr.bf16.mxu0 0
    %874 = vmatpush1.bf16.msra.mxu0 0
    %875 = vmatprep.subr.bf16.mxu0 0
    %876 = vmatpush1.bf16.msra.mxu0 0
    %877 = vmatprep.subr.bf16.mxu0 0
    %878 = vmatpush1.bf16.msra.mxu0 0
    %879 = vmatprep.subr.bf16.mxu0 0
    %880 = vmatpush1.bf16.msra.mxu0 0
    %881 = vmatprep.subr.bf16.mxu0 0
    %882 = vmatpush1.bf16.msra.mxu0 0
    %883 = vmatprep.subr.bf16.mxu0 0
    %884 = vmatpush1.bf16.msra.mxu0 0
    %885 = vmatprep.subr.bf16.mxu0 0
    %886 = vmatpush1.bf16.msra.mxu0 0
    %887 = vmatprep.subr.bf16.mxu0 0
    %888 = vmatpush1.bf16.msra.mxu0 0
    %889 = vmatprep.subr.bf16.mxu0 0
    %890 = vmatpush1.bf16.msra.mxu0 0
    %891 = vmatprep.mubr.bf16.mxu0 0
    %892 = vmatmul.mubr.bf16.gmra.mrb[0].mxu0 %v857
    %v893 = vpop.f32.mrb[0].mxu0
    %v894 = vadd.f32 0.0, %v893
    %v895 = vpop.f32.mrb[0].mxu0
    %v896 = vadd.f32 0.0, %v895
    %v897 = vpop.f32.mrb[0].mxu0
    %v898 = vpop.f32.mrb[0].mxu0
    %899 = vdwg.mxu0
    %v902 = vcombine.low %v894, %v896
    %v904 = vunpack.c.l.s4 1983009808
    %v905 = vunpack.c.0.s8 %v904
    %v906 = vlaneseq
    %v907 = vshrl.u32 %v906, 7
    %v908 = vsub.s32 %v905, %v907
    %v909 = vrot.slane %v902, %v908
    %v911 = vadd.f32 %v339, %v909
    %v912 = vxor.u32 %v911, 2147483648
    %v913 = vmul.f32 %v912, 1.442695
    %v914 = vpow.pop %v913
    %v915 = vadd.f32 %v914, 1.0
    %v916 = vrcp.pop %v915
    %v917 = vmul.f32 1.0, %v916
    %v919 = vrot.slane %v917, 2
    %v921 = vmul.f32 %v919, 2.0
    %v922 = vsub.f32 %v921, 1.0
    %v923 = vmul.f32 %v917, %v842
    %v924 = vmul.f32 %v917, %v922
    %926 = vrot.lane.b32.xlu0 %v924, 64
    %v927 = vpop.permute.xlu0 %926
    %v929 = vadd.f32 %v923, %v927
    %v930 = vtanh.pop %v929
    %931 = vrot.lane.b32.xlu0 %v917, 64
    %v932 = vpop.permute.xlu0 %931
    %v933 = vrot.slane %v932, 2
    %936 = vrot.lane.b32.xlu0 %v930, 64
    %v937 = vpop.permute.xlu0 %936
    %v939 = vmul.f32 %v933, %v937
    %v940 = vmax.f32 %v939, 0.0
    %942 = vrot.lane.b32.xlu0 %v940, 64
    %v943 = vpop.permute.xlu0 %942
    %945 = vst.msk [vmem:[#allocation2 + $0x4] sm:$0x3] %vm588, %v943
    %v946 = vpack.c.bf16 %v939, %v939
    %v948 = vsel %vm254, %v946, 0
    %950 = vmatprep.subr.bf16.mxu0 %v385
    %951 = vmatpush1.bf16.msra.mxu0 %v384
    %952 = vmatprep.subr.bf16.mxu0 %v387
    %953 = vmatpush1.bf16.msra.mxu0 %v386
    %954 = vmatprep.subr.bf16.mxu0 %v389
    %955 = vmatpush1.bf16.msra.mxu0 %v388
    %956 = vmatprep.subr.bf16.mxu0 %v391
    %957 = vmatpush1.bf16.msra.mxu0 %v390
    %958 = vmatprep.subr.bf16.mxu0 0
    %959 = vmatpush1.bf16.msra.mxu0 0
    %960 = vmatprep.subr.bf16.mxu0 0
    %961 = vmatpush1.bf16.msra.mxu0 0
    %962 = vmatprep.subr.bf16.mxu0 0
    %963 = vmatpush1.bf16.msra.mxu0 0
    %964 = vmatprep.subr.bf16.mxu0 0
    %965 = vmatpush1.bf16.msra.mxu0 0
    %966 = vmatprep.subr.bf16.mxu0 0
    %967 = vmatpush1.bf16.msra.mxu0 0
    %968 = vmatprep.subr.bf16.mxu0 0
    %969 = vmatpush1.bf16.msra.mxu0 0
    %970 = vmatprep.subr.bf16.mxu0 0
    %971 = vmatpush1.bf16.msra.mxu0 0
    %972 = vmatprep.subr.bf16.mxu0 0
    %973 = vmatpush1.bf16.msra.mxu0 0
    %974 = vmatprep.subr.bf16.mxu0 0
    %975 = vmatpush1.bf16.msra.mxu0 0
    %976 = vmatprep.subr.bf16.mxu0 0
    %977 = vmatpush1.bf16.msra.mxu0 0
    %978 = vmatprep.subr.bf16.mxu0 0
    %979 = vmatpush1.bf16.msra.mxu0 0
    %980 = vmatprep.subr.bf16.mxu0 0
    %981 = vmatpush1.bf16.msra.mxu0 0
    %982 = vmatprep.mubr.bf16.mxu0 0
    %983 = vmatmul.mubr.bf16.gmra.mrb[0].mxu0 %v948
    %v984 = vpop.f32.mrb[0].mxu0
    %v985 = vadd.f32 0.0, %v984
    %v986 = vpop.f32.mrb[0].mxu0
    %v987 = vadd.f32 0.0, %v986
    %v988 = vpop.f32.mrb[0].mxu0
    %v989 = vpop.f32.mrb[0].mxu0
    %990 = vdwg.mxu0
    %v993 = vcombine.low %v985, %v987
    %v995 = vunpack.c.l.s4 1983009808
    %v996 = vunpack.c.0.s8 %v995
    %v997 = vlaneseq
    %v998 = vshrl.u32 %v997, 7
    %v999 = vsub.s32 %v996, %v998
    %v1000 = vrot.slane %v993, %v999
    %v1002 = vadd.f32 %v338, %v1000
    %v1003 = vxor.u32 %v1002, 2147483648
    %v1004 = vmul.f32 %v1003, 1.442695
    %v1005 = vpow.pop %v1004
    %v1006 = vadd.f32 %v1005, 1.0
    %v1007 = vrcp.pop %v1006
    %v1008 = vmul.f32 1.0, %v1007
    %v1010 = vrot.slane %v1008, 2
    %v1012 = vmul.f32 %v1010, 2.0
    %v1013 = vsub.f32 %v1012, 1.0
    %v1014 = vmul.f32 %v1008, %v929
    %v1015 = vmul.f32 %v1008, %v1013
    %1017 = vrot.lane.b32.xlu0 %v1015, 64
    %v1018 = vpop.permute.xlu0 %1017
    %v1020 = vadd.f32 %v1014, %v1018
    %v1021 = vtanh.pop %v1020
    %1022 = vrot.lane.b32.xlu0 %v1008, 64
    %v1023 = vpop.permute.xlu0 %1022
    %v1024 = vrot.slane %v1023, 2
    %1027 = vrot.lane.b32.xlu0 %v1021, 64
    %v1028 = vpop.permute.xlu0 %1027
    %v1030 = vmul.f32 %v1024, %v1028
    %v1031 = vmax.f32 %v1030, 0.0
    %1032 = vst.msk [vmem:[#allocation2 + $0x6] sm:$0x3] %vm496, %v1031
    %v1033 = vpack.c.bf16 %v1030, %v1030
    %v1035 = vsel %vm254, %v1033, 0
    %1037 = vmatprep.subr.bf16.mxu0 %v385
    %1038 = vmatpush1.bf16.msra.mxu0 %v384
    %1039 = vmatprep.subr.bf16.mxu0 %v387
    %1040 = vmatpush1.bf16.msra.mxu0 %v386
    %1041 = vmatprep.subr.bf16.mxu0 %v389
    %1042 = vmatpush1.bf16.msra.mxu0 %v388
    %1043 = vmatprep.subr.bf16.mxu0 %v391
    %1044 = vmatpush1.bf16.msra.mxu0 %v390
    %1045 = vmatprep.subr.bf16.mxu0 0
    %1046 = vmatpush1.bf16.msra.mxu0 0
    %1047 = vmatprep.subr.bf16.mxu0 0
    %1048 = vmatpush1.bf16.msra.mxu0 0
    %1049 = vmatprep.subr.bf16.mxu0 0
    %1050 = vmatpush1.bf16.msra.mxu0 0
    %1051 = vmatprep.subr.bf16.mxu0 0
    %1052 = vmatpush1.bf16.msra.mxu0 0
    %1053 = vmatprep.subr.bf16.mxu0 0
    %1054 = vmatpush1.bf16.msra.mxu0 0
    %1055 = vmatprep.subr.bf16.mxu0 0
    %1056 = vmatpush1.bf16.msra.mxu0 0
    %1057 = vmatprep.subr.bf16.mxu0 0
    %1058 = vmatpush1.bf16.msra.mxu0 0
    %1059 = vmatprep.subr.bf16.mxu0 0
    %1060 = vmatpush1.bf16.msra.mxu0 0
    %1061 = vmatprep.subr.bf16.mxu0 0
    %1062 = vmatpush1.bf16.msra.mxu0 0
    %1063 = vmatprep.subr.bf16.mxu0 0
    %1064 = vmatpush1.bf16.msra.mxu0 0
    %1065 = vmatprep.subr.bf16.mxu0 0
    %1066 = vmatpush1.bf16.msra.mxu0 0
    %1067 = vmatprep.subr.bf16.mxu0 0
    %1068 = vmatpush1.bf16.msra.mxu0 0
    %1069 = vmatprep.mubr.bf16.mxu0 0
    %1070 = vmatmul.mubr.bf16.gmra.mrb[0].mxu0 %v1035
    %v1071 = vpop.f32.mrb[0].mxu0
    %v1072 = vadd.f32 0.0, %v1071
    %v1073 = vpop.f32.mrb[0].mxu0
    %v1074 = vadd.f32 0.0, %v1073
    %v1075 = vpop.f32.mrb[0].mxu0
    %v1076 = vpop.f32.mrb[0].mxu0
    %1077 = vdwg.mxu0
    %v1080 = vcombine.low %v1072, %v1074
    %v1082 = vunpack.c.l.s4 1983009808
    %v1083 = vunpack.c.0.s8 %v1082
    %v1084 = vlaneseq
    %v1085 = vshrl.u32 %v1084, 7
    %v1086 = vsub.s32 %v1083, %v1085
    %v1087 = vrot.slane %v1080, %v1086
    %v1089 = vadd.f32 %v340, %v1087
    %v1090 = vxor.u32 %v1089, 2147483648
    %v1091 = vmul.f32 %v1090, 1.442695
    %v1092 = vpow.pop %v1091
    %v1093 = vadd.f32 %v1092, 1.0
    %v1094 = vrcp.pop %v1093
    %v1095 = vmul.f32 1.0, %v1094
    %v1097 = vrot.slane %v1095, 2
    %v1099 = vmul.f32 %v1097, 2.0
    %v1100 = vsub.f32 %v1099, 1.0
    %v1101 = vmul.f32 %v1095, %v1020
    %v1102 = vmul.f32 %v1095, %v1100
    %1104 = vrot.lane.b32.xlu0 %v1102, 64
    %v1105 = vpop.permute.xlu0 %1104
    %v1107 = vadd.f32 %v1101, %v1105
    %v1108 = vtanh.pop %v1107
    %1109 = vrot.lane.b32.xlu0 %v1095, 64
    %v1110 = vpop.permute.xlu0 %1109
    %v1111 = vrot.slane %v1110, 2
    %1114 = vrot.lane.b32.xlu0 %v1108, 64
    %v1115 = vpop.permute.xlu0 %1114
    %v1117 = vmul.f32 %v1111, %v1115
    %v1118 = vmax.f32 %v1117, 0.0
    %1120 = vrot.lane.b32.xlu0 %v1118, 64
    %v1121 = vpop.permute.xlu0 %1120
    %1123 = vst.msk [vmem:[#allocation2 + $0x6] sm:$0x3] %vm588, %v1121
    %v1124 = vld [vmem:[#allocation2] sm:$0xff]
    %v1126 = vcombine.high %v1124, %v1124
    %v1128 = vunpack.c.l.s4 1983009808
    %v1129 = vunpack.c.0.s8 %v1128
    %v1130 = vlaneseq
    %v1131 = vshrl.u32 %v1130, 7
    %v1132 = vsub.s32 %v1129, %v1131
    %v1133 = vrot.slane %v1124, %v1132
    %v1135 = vunpack.c.l.s4 1983009808
    %v1136 = vunpack.c.0.s8 %v1135
    %v1137 = vlaneseq
    %v1138 = vshrl.u32 %v1137, 7
    %v1139 = vsub.s32 %v1136, %v1138
    %v1140 = vrot.slane %v1126, %v1139
    %v1141 = vcombine.high %v1133, %v1133
    %v1142 = vcombine.high %v1140, %v1140
    %v1147 = vpack.c.bf16 %v1133, %v1133
    %v1148 = vpack.c.bf16 %v1141, %v1141
    %v1149 = vpack.c.bf16 %v1140, %v1140
    %v1150 = vpack.c.bf16 %v1142, %v1142
    %v1151 = vld [vmem:[#allocation8] sm:$0xf]
    %v1152 = vld [vmem:[#allocation8 + $0x4] sm:$0xf]
    %v1153 = vld [vmem:[#allocation8 + $0x8] sm:$0xf]
    %v1154 = vld [vmem:[#allocation8 + $0xc] sm:$0xf]
    %v1155 = vld [vmem:[#allocation8 + $0x10] sm:$0xf]
    %v1156 = vld [vmem:[#allocation8 + $0x14] sm:$0xf]
    %v1157 = vld [vmem:[#allocation8 + $0x18] sm:$0xf]
    %v1158 = vld [vmem:[#allocation8 + $0x1c] sm:$0xf]
    %v1159 = vld [vmem:[#allocation8 + $0x20] sm:$0xf]
    %v1160 = vld [vmem:[#allocation8 + $0x24] sm:$0xf]
    %v1161 = vld [vmem:[#allocation8 + $0x28] sm:$0xf]
    %v1162 = vld [vmem:[#allocation8 + $0x2c] sm:$0xf]
    %v1163 = vld [vmem:[#allocation8 + $0x30] sm:$0xf]
    %v1164 = vld [vmem:[#allocation8 + $0x34] sm:$0xf]
    %v1165 = vld [vmem:[#allocation8 + $0x38] sm:$0xf]
    %v1166 = vld [vmem:[#allocation8 + $0x3c] sm:$0xf]
    %v1167 = vld [vmem:[#allocation8 + $0x40] sm:$0xf]
    %v1168 = vld [vmem:[#allocation8 + $0x44] sm:$0xf]
    %v1169 = vld [vmem:[#allocation8 + $0x48] sm:$0xf]
    %v1170 = vld [vmem:[#allocation8 + $0x4c] sm:$0xf]
    %v1171 = vld [vmem:[#allocation8 + $0x50] sm:$0xf]
    %v1172 = vld [vmem:[#allocation8 + $0x54] sm:$0xf]
    %v1173 = vld [vmem:[#allocation8 + $0x58] sm:$0xf]
    %v1174 = vld [vmem:[#allocation8 + $0x5c] sm:$0xf]
    %v1175 = vld [vmem:[#allocation8 + $0x60] sm:$0xf]
    %v1176 = vld [vmem:[#allocation8 + $0x64] sm:$0xf]
    %v1177 = vld [vmem:[#allocation8 + $0x68] sm:$0xf]
    %v1178 = vld [vmem:[#allocation8 + $0x6c] sm:$0xf]
    %v1179 = vld [vmem:[#allocation8 + $0x70] sm:$0xf]
    %v1180 = vld [vmem:[#allocation8 + $0x74] sm:$0xf]
    %v1181 = vld [vmem:[#allocation8 + $0x78] sm:$0xf]
    %v1182 = vld [vmem:[#allocation8 + $0x7c] sm:$0xf]
    %v1183 = vld [vmem:[#allocation8 + $0x80] sm:$0xf]
    %v1184 = vld [vmem:[#allocation8 + $0x84] sm:$0xf]
    %v1185 = vld [vmem:[#allocation8 + $0x88] sm:$0xf]
    %v1186 = vld [vmem:[#allocation8 + $0x8c] sm:$0xf]
    %v1187 = vld [vmem:[#allocation8 + $0x90] sm:$0xf]
    %v1188 = vld [vmem:[#allocation8 + $0x94] sm:$0xf]
    %v1189 = vld [vmem:[#allocation8 + $0x98] sm:$0xf]
    %v1190 = vld [vmem:[#allocation8 + $0x9c] sm:$0xf]
    %v1191 = vld [vmem:[#allocation8 + $0xa0] sm:$0xf]
    %v1192 = vld [vmem:[#allocation8 + $0xa4] sm:$0xf]
    %v1193 = vld [vmem:[#allocation8 + $0xa8] sm:$0xf]
    %v1194 = vld [vmem:[#allocation8 + $0xac] sm:$0xf]
    %v1195 = vld [vmem:[#allocation8 + $0xb0] sm:$0xf]
    %v1196 = vld [vmem:[#allocation8 + $0xb4] sm:$0xf]
    %v1197 = vld [vmem:[#allocation8 + $0xb8] sm:$0xf]
    %v1198 = vld [vmem:[#allocation8 + $0xbc] sm:$0xf]
    %v1199 = vld [vmem:[#allocation8 + $0xc0] sm:$0xf]
    %v1200 = vld [vmem:[#allocation8 + $0xc4] sm:$0xf]
    %v1201 = vld [vmem:[#allocation8 + $0xc8] sm:$0xf]
    %v1202 = vld [vmem:[#allocation8 + $0xcc] sm:$0xf]
    %v1203 = vld [vmem:[#allocation8 + $0xd0] sm:$0xf]
    %v1204 = vld [vmem:[#allocation8 + $0xd4] sm:$0xf]
    %v1205 = vld [vmem:[#allocation8 + $0xd8] sm:$0xf]
    %v1206 = vld [vmem:[#allocation8 + $0xdc] sm:$0xf]
    %v1207 = vld [vmem:[#allocation8 + $0xe0] sm:$0xf]
    %v1208 = vld [vmem:[#allocation8 + $0xe4] sm:$0xf]
    %v1209 = vld [vmem:[#allocation8 + $0xe8] sm:$0xf]
    %v1210 = vld [vmem:[#allocation8 + $0xec] sm:$0xf]
    %v1211 = vld [vmem:[#allocation8 + $0xf0] sm:$0xf]
    %v1212 = vld [vmem:[#allocation8 + $0xf4] sm:$0xf]
    %v1213 = vld [vmem:[#allocation8 + $0xf8] sm:$0xf]
    %v1214 = vld [vmem:[#allocation8 + $0xfc] sm:$0xf]
    %v1215 = vld [vmem:[%s9] sm:$0x1]
    %v1217 = vlaneseq
    %v1218 = vshrl.u32 %v1217, 7
    %v1219 = vsub.s32 0, %v1218
    %v1220 = vrot.slane %v1215, %v1219
    %v1286 = vunpack.c.l.b16 %v1151
    %v1287 = vunpack.c.l.b16 %v1152
    %v1288 = vunpack.c.l.b16 %v1153
    %v1289 = vunpack.c.l.b16 %v1154
    %v1290 = vunpack.c.l.b16 %v1155
    %v1291 = vunpack.c.l.b16 %v1156
    %v1292 = vunpack.c.l.b16 %v1157
    %v1293 = vunpack.c.l.b16 %v1158
    %v1294 = vunpack.c.l.b16 %v1159
    %v1295 = vunpack.c.l.b16 %v1160
    %v1296 = vunpack.c.l.b16 %v1161
    %v1297 = vunpack.c.l.b16 %v1162
    %v1298 = vunpack.c.l.b16 %v1163
    %v1299 = vunpack.c.l.b16 %v1164
    %v1300 = vunpack.c.l.b16 %v1165
    %v1301 = vunpack.c.l.b16 %v1166
    %v1302 = vunpack.c.l.b16 %v1167
    %v1303 = vunpack.c.l.b16 %v1168
    %v1304 = vunpack.c.l.b16 %v1169
    %v1305 = vunpack.c.l.b16 %v1170
    %v1306 = vunpack.c.l.b16 %v1171
    %v1307 = vunpack.c.l.b16 %v1172
    %v1308 = vunpack.c.l.b16 %v1173
    %v1309 = vunpack.c.l.b16 %v1174
    %v1310 = vunpack.c.l.b16 %v1175
    %v1311 = vunpack.c.l.b16 %v1176
    %v1312 = vunpack.c.l.b16 %v1177
    %v1313 = vunpack.c.l.b16 %v1178
    %v1314 = vunpack.c.l.b16 %v1179
    %v1315 = vunpack.c.l.b16 %v1180
    %v1316 = vunpack.c.l.b16 %v1181
    %v1317 = vunpack.c.l.b16 %v1182
    %v1318 = vunpack.c.l.b16 %v1183
    %v1319 = vunpack.c.l.b16 %v1184
    %v1320 = vunpack.c.l.b16 %v1185
    %v1321 = vunpack.c.l.b16 %v1186
    %v1322 = vunpack.c.l.b16 %v1187
    %v1323 = vunpack.c.l.b16 %v1188
    %v1324 = vunpack.c.l.b16 %v1189
    %v1325 = vunpack.c.l.b16 %v1190
    %v1326 = vunpack.c.l.b16 %v1191
    %v1327 = vunpack.c.l.b16 %v1192
    %v1328 = vunpack.c.l.b16 %v1193
    %v1329 = vunpack.c.l.b16 %v1194
    %v1330 = vunpack.c.l.b16 %v1195
    %v1331 = vunpack.c.l.b16 %v1196
    %v1332 = vunpack.c.l.b16 %v1197
    %v1333 = vunpack.c.l.b16 %v1198
    %v1334 = vunpack.c.l.b16 %v1199
    %v1335 = vunpack.c.l.b16 %v1200
    %v1336 = vunpack.c.l.b16 %v1201
    %v1337 = vunpack.c.l.b16 %v1202
    %v1338 = vunpack.c.l.b16 %v1203
    %v1339 = vunpack.c.l.b16 %v1204
    %v1340 = vunpack.c.l.b16 %v1205
    %v1341 = vunpack.c.l.b16 %v1206
    %v1342 = vunpack.c.l.b16 %v1207
    %v1343 = vunpack.c.l.b16 %v1208
    %v1344 = vunpack.c.l.b16 %v1209
    %v1345 = vunpack.c.l.b16 %v1210
    %v1346 = vunpack.c.l.b16 %v1211
    %v1347 = vunpack.c.l.b16 %v1212
    %v1348 = vunpack.c.l.b16 %v1213
    %v1349 = vunpack.c.l.b16 %v1214
    %v1350 = vpack.c.b16 %v1287, %v1286
    %v1351 = vpack.c.b16 %v1289, %v1288
    %v1352 = vpack.c.b16 %v1291, %v1290
    %v1353 = vpack.c.b16 %v1293, %v1292
    %v1354 = vpack.c.b16 %v1295, %v1294
    %v1355 = vpack.c.b16 %v1297, %v1296
    %v1356 = vpack.c.b16 %v1299, %v1298
    %v1357 = vpack.c.b16 %v1301, %v1300
    %v1358 = vpack.c.b16 %v1303, %v1302
    %v1359 = vpack.c.b16 %v1305, %v1304
    %v1360 = vpack.c.b16 %v1307, %v1306
    %v1361 = vpack.c.b16 %v1309, %v1308
    %v1362 = vpack.c.b16 %v1311, %v1310
    %v1363 = vpack.c.b16 %v1313, %v1312
    %v1364 = vpack.c.b16 %v1315, %v1314
    %v1365 = vpack.c.b16 %v1317, %v1316
    %v1366 = vpack.c.b16 %v1319, %v1318
    %v1367 = vpack.c.b16 %v1321, %v1320
    %v1368 = vpack.c.b16 %v1323, %v1322
    %v1369 = vpack.c.b16 %v1325, %v1324
    %v1370 = vpack.c.b16 %v1327, %v1326
    %v1371 = vpack.c.b16 %v1329, %v1328
    %v1372 = vpack.c.b16 %v1331, %v1330
    %v1373 = vpack.c.b16 %v1333, %v1332
    %v1374 = vpack.c.b16 %v1335, %v1334
    %v1375 = vpack.c.b16 %v1337, %v1336
    %v1376 = vpack.c.b16 %v1339, %v1338
    %v1377 = vpack.c.b16 %v1341, %v1340
    %v1378 = vpack.c.b16 %v1343, %v1342
    %v1379 = vpack.c.b16 %v1345, %v1344
    %v1380 = vpack.c.b16 %v1347, %v1346
    %v1381 = vpack.c.b16 %v1349, %v1348
    %1414 = vmatprep.subr.bf16.mxu0 0
    %1415 = vmatpush1.bf16.msra.mxu0 %v1350
    %1416 = vmatprep.subr.bf16.mxu0 0
    %1417 = vmatpush1.bf16.msra.mxu0 %v1351
    %1418 = vmatprep.subr.bf16.mxu0 0
    %1419 = vmatpush1.bf16.msra.mxu0 %v1352
    %1420 = vmatprep.subr.bf16.mxu0 0
    %1421 = vmatpush1.bf16.msra.mxu0 %v1353
    %1422 = vmatprep.subr.bf16.mxu0 0
    %1423 = vmatpush1.bf16.msra.mxu0 %v1354
    %1424 = vmatprep.subr.bf16.mxu0 0
    %1425 = vmatpush1.bf16.msra.mxu0 %v1355
    %1426 = vmatprep.subr.bf16.mxu0 0
    %1427 = vmatpush1.bf16.msra.mxu0 %v1356
    %1428 = vmatprep.subr.bf16.mxu0 0
    %1429 = vmatpush1.bf16.msra.mxu0 %v1357
    %1430 = vmatprep.subr.bf16.mxu0 0
    %1431 = vmatpush1.bf16.msra.mxu0 %v1358
    %1432 = vmatprep.subr.bf16.mxu0 0
    %1433 = vmatpush1.bf16.msra.mxu0 %v1359
    %1434 = vmatprep.subr.bf16.mxu0 0
    %1435 = vmatpush1.bf16.msra.mxu0 %v1360
    %1436 = vmatprep.subr.bf16.mxu0 0
    %1437 = vmatpush1.bf16.msra.mxu0 %v1361
    %1438 = vmatprep.subr.bf16.mxu0 0
    %1439 = vmatpush1.bf16.msra.mxu0 %v1362
    %1440 = vmatprep.subr.bf16.mxu0 0
    %1441 = vmatpush1.bf16.msra.mxu0 %v1363
    %1442 = vmatprep.subr.bf16.mxu0 0
    %1443 = vmatpush1.bf16.msra.mxu0 %v1364
    %1444 = vmatprep.subr.bf16.mxu0 0
    %1445 = vmatpush1.bf16.msra.mxu0 %v1365
    %1446 = vmatprep.mubr.bf16.mxu0 %v1148
    %1447 = vmatmul.mubr.bf16.gmra.mrb[0].mxu0 %v1147
    %v1448 = vpop.f32.mrb[0].mxu0
    %v1449 = vadd.f32 %v1220, %v1448
    %v1450 = vpop.f32.mrb[0].mxu0
    %v1451 = vpop.f32.mrb[0].mxu0
    %v1452 = vpop.f32.mrb[0].mxu0
    %1453 = vdwg.mxu0
    %1454 = vmatprep.subr.bf16.mxu0 0
    %1455 = vmatpush1.bf16.msra.mxu0 %v1366
    %1456 = vmatprep.subr.bf16.mxu0 0
    %1457 = vmatpush1.bf16.msra.mxu0 %v1367
    %1458 = vmatprep.subr.bf16.mxu0 0
    %1459 = vmatpush1.bf16.msra.mxu0 %v1368
    %1460 = vmatprep.subr.bf16.mxu0 0
    %1461 = vmatpush1.bf16.msra.mxu0 %v1369
    %1462 = vmatprep.subr.bf16.mxu0 0
    %1463 = vmatpush1.bf16.msra.mxu0 %v1370
    %1464 = vmatprep.subr.bf16.mxu0 0
    %1465 = vmatpush1.bf16.msra.mxu0 %v1371
    %1466 = vmatprep.subr.bf16.mxu0 0
    %1467 = vmatpush1.bf16.msra.mxu0 %v1372
    %1468 = vmatprep.subr.bf16.mxu0 0
    %1469 = vmatpush1.bf16.msra.mxu0 %v1373
    %1470 = vmatprep.subr.bf16.mxu0 0
    %1471 = vmatpush1.bf16.msra.mxu0 %v1374
    %1472 = vmatprep.subr.bf16.mxu0 0
    %1473 = vmatpush1.bf16.msra.mxu0 %v1375
    %1474 = vmatprep.subr.bf16.mxu0 0
    %1475 = vmatpush1.bf16.msra.mxu0 %v1376
    %1476 = vmatprep.subr.bf16.mxu0 0
    %1477 = vmatpush1.bf16.msra.mxu0 %v1377
    %1478 = vmatprep.subr.bf16.mxu0 0
    %1479 = vmatpush1.bf16.msra.mxu0 %v1378
    %1480 = vmatprep.subr.bf16.mxu0 0
    %1481 = vmatpush1.bf16.msra.mxu0 %v1379
    %1482 = vmatprep.subr.bf16.mxu0 0
    %1483 = vmatpush1.bf16.msra.mxu0 %v1380
    %1484 = vmatprep.subr.bf16.mxu0 0
    %1485 = vmatpush1.bf16.msra.mxu0 %v1381
    %1486 = vmatprep.mubr.bf16.mxu0 %v1150
    %1487 = vmatmul.mubr.bf16.gmra.mrb[0].mxu0 %v1149
    %v1488 = vpop.f32.mrb[0].mxu0
    %v1489 = vadd.f32 %v1449, %v1488
    %v1490 = vpop.f32.mrb[0].mxu0
    %v1491 = vpop.f32.mrb[0].mxu0
    %v1492 = vpop.f32.mrb[0].mxu0
    %1493 = vdwg.mxu0
    %1494 = vst [vmem:[#allocation9] sm:$0x3] %v1489
    %v1495 = vsel %vm254, %v1117, %v1107
    %1496 = vst [vmem:[#allocation10] sm:$0x3] %v1495
    // Predicated region
    $region54: #{tpu_custom_call.1} parent=1 // pred_check
      _
    $region55: #{tpu_custom_call.1} parent=1 // pred_check_branch
      %1498 = sbr.rel (0) target = $region57
    $region56: #{tpu_custom_call.1} parent=1 // pred_region
      %s1500 = ssub.s32 32, 32
      %1501 = vsyncadd [#allocation5], %s1500
      %s1503 = sshll.u32 [#allocation9], 4
      %s1504 = int_to_ptr.vmem [resolvable:$true] %s1503
      %1506 = dma.vmem_to_hbm [thread:$0]  %s1504, 32, %s10, [#allocation5]
    $region57: #{tpu_custom_call.1} parent=1 // pred_fallthru
      _
    // Predicated region
    $region58: #{tpu_custom_call.1} parent=1 // pred_check
      _
    $region59: #{tpu_custom_call.1} parent=1 // pred_check_branch
      %1508 = sbr.rel (0) target = $region61
    $region60: #{tpu_custom_call.1} parent=1 // pred_region
      %s1510 = ssub.s32 32, 32
      %1511 = vsyncadd [#allocation11], %s1510
      %s1513 = sshll.u32 [#allocation10], 4
      %s1514 = int_to_ptr.vmem [resolvable:$true] %s1513
      %1516 = dma.vmem_to_hbm [thread:$0]  %s1514, 32, %s11, [#allocation11]
    $region61: #{tpu_custom_call.1} parent=1 // pred_fallthru
      _
    // Predicated region
    $region62: #{tpu_custom_call.1} parent=1 // pred_check
      _
    $region63: #{tpu_custom_call.1} parent=1 // pred_check_branch
      %1518 = sbr.rel (0) target = $region65
    $region64: #{tpu_custom_call.1} parent=1 // pred_region
      %1519 = dma.done [#allocation5], 32
    $region65: #{tpu_custom_call.1} parent=1 // pred_fallthru
      _
    // Predicated region
    $region66: #{tpu_custom_call.1} parent=1 // pred_check
      _
    $region67: #{tpu_custom_call.1} parent=1 // pred_check_branch
      %1521 = sbr.rel (0) target = $region69
    $region68: #{tpu_custom_call.1} parent=1 // pred_region
      %1522 = dma.done [#allocation11], 32
    $region69: #{tpu_custom_call.1} parent=1 // pred_fallthru
      _
    %1523 = vsyncpa [#allocation4], 1
    %1524 = vsyncpa [#allocation7], 1
    %1525 = vsyncpa [#allocation5], 1
    %1526 = vsyncpa [#allocation11], 1

</llo_original>
